<compile_context>
chip_gen: v7x
topology: tpu7x:2x2x1
jax: 0.10.0
libtpu: 0.0.40
codegen_flags: <defaults>
</compile_context>

<pallas_src>
import functools

import jax
import jax.numpy as jnp
from jax.experimental import pallas as pl
from jax.experimental.pallas import tpu as pltpu

# ---- module hyper-parameters (PyTorch defaults) ------------------------------
HID = 100          # hidden_size
NUM_HIDDEN = 7     # num_hidden_layers
INIT = 2           # init_size
OUT = 3            # output_size
NEG_SLOPE = 0.01   # nn.LeakyReLU default negative_slope

# ---- TPU-friendly padded widths ----------------------------------------------
HID_PAD = 128               # hidden / output width padded to one full lane register
INIT_PAD = 8                # init_size (+ bias column) padded to one sublane
NL = NUM_HIDDEN + 1         # hidden layers + outLayer share the stacked wc / wp
XBLOCKS = NUM_HIDDEN + 2    # inLayer + 7 hidden + outLayer x-blocks
XW = XBLOCKS * HID_PAD      # width of the fused x-projection weight


def _round_up(x, m):
    return (x + m - 1) // m * m


def _leaky(v):
    return jnp.where(v > 0, v, NEG_SLOPE * v)


# --------------------------------------------------------------------- kernel
def _skip_mlp_kernel(x_ref, wc_ref, wp_ref, wx_ref, o_ref, *, output_activation):
    xv = x_ref[...]                                        # (BT, INIT_PAD), col INIT == 1.0

    # Every layer's x-contribution AND bias in one MXU op (bias folded via the
    # homogeneous 1.0 column of x).  Result is sliced lane-aligned per layer.
    xz = jnp.dot(xv, wx_ref[...], preferred_element_type=jnp.float32)  # (BT, 9*128)

    # inLayer + LeakyReLU
    cur = _leaky(xz[:, :HID_PAD])
    prev = jnp.zeros_like(cur)                             # 'previous' starts empty

    # 7 skip-connection hidden layers, fully unrolled (static weight indices give
    # the LLO scheduler full visibility; trip count is tiny).
    for i in range(NUM_HIDDEN):
        # Linear(cat([current, previous, x])) == cur@Wc + prev@Wp + (x@Wx + b)
        z = (jnp.dot(cur, wc_ref[i], preferred_element_type=jnp.float32)
             + xz[:, (i + 1) * HID_PAD:(i + 2) * HID_PAD])
        if i > 0:                                          # layer 0 has no 'previous'
            z = z + jnp.dot(prev, wp_ref[i], preferred_element_type=jnp.float32)
        prev, cur = cur, _leaky(z)

    # outLayer on cat([current, previous, x])
    z = (jnp.dot(cur, wc_ref[NUM_HIDDEN], preferred_element_type=jnp.float32)
         + jnp.dot(prev, wp_ref[NUM_HIDDEN], preferred_element_type=jnp.float32)
         + xz[:, (NUM_HIDDEN + 1) * HID_PAD:(NUM_HIDDEN + 2) * HID_PAD])

    if output_activation == "sigmoid":
        y = 1.0 / (1.0 + jnp.exp(-z))
    else:                                                  # default 'tanh'
        y = 0.5 * (jnp.tanh(z) + 1.0)
    o_ref[...] = y                                         # (BT, 128) lane-dense, unmasked vst


# ------------------------------------------------------------------ parameters
def init_params(key):
    """PyTorch-layout parameters: each Linear is (weight (out,in), bias (out,))."""
    def linear(k, fan_in, fan_out):
        kw, kb = jax.random.split(k)
        bound = 1.0 / (fan_in ** 0.5)                      # nn.Linear default init
        w = jax.random.uniform(kw, (fan_out, fan_in), jnp.float32, -bound, bound)
        b = jax.random.uniform(kb, (fan_out,), jnp.float32, -bound, bound)
        return w, b

    keys = jax.random.split(key, NUM_HIDDEN + 2)
    in_layer = linear(keys[0], INIT, HID)
    hidden = []
    for i in range(NUM_HIDDEN):
        in_size = HID * 2 + INIT if i > 0 else HID + INIT
        hidden.append(linear(keys[1 + i], in_size, HID))
    out_layer = linear(keys[-1], HID * 2 + INIT, OUT)
    return in_layer, tuple(hidden), out_layer


def pack_params(params):
    """Split each Linear along the cat([cur, prev, x]) boundary, pad to lane-aligned
    widths, stack into 3 tensors, and fold every bias into the x-projection weight
    (row INIT of wx multiplies the constant-1 column of the padded input)."""
    (w_in, b_in), hidden, (w_out, b_out) = params
    f32 = jnp.float32

    wc = jnp.zeros((NL, HID_PAD, HID_PAD), f32)
    wp = jnp.zeros((NL, HID_PAD, HID_PAD), f32)            # slot 0 stays zero (unused)
    wx = jnp.zeros((INIT_PAD, XW), f32)

    # inLayer -> x-block 0
    wx = wx.at[:INIT, :HID].set(w_in.T)
    wx = wx.at[INIT, :HID].set(b_in)

    # hidden layers -> wc[i], wp[i], x-block (i+1)
    for i, (w, b) in enumerate(hidden):
        wt = w.T                                           # (in_size, HID)
        c0 = (i + 1) * HID_PAD
        wc = wc.at[i, :HID, :HID].set(wt[:HID])
        if i == 0:                                         # cat([cur, x])
            wx = wx.at[:INIT, c0:c0 + HID].set(wt[HID:HID + INIT])
        else:                                              # cat([cur, prev, x])
            wp = wp.at[i, :HID, :HID].set(wt[HID:2 * HID])
            wx = wx.at[:INIT, c0:c0 + HID].set(wt[2 * HID:2 * HID + INIT])
        wx = wx.at[INIT, c0:c0 + HID].set(b)

    # outLayer -> wc[7], wp[7], x-block 8
    wt = w_out.T                                           # (202, OUT)
    c0 = (NUM_HIDDEN + 1) * HID_PAD
    wc = wc.at[NUM_HIDDEN, :HID, :OUT].set(wt[:HID])
    wp = wp.at[NUM_HIDDEN, :HID, :OUT].set(wt[HID:2 * HID])
    wx = wx.at[:INIT, c0:c0 + OUT].set(wt[2 * HID:2 * HID + INIT])
    wx = wx.at[INIT, c0:c0 + OUT].set(b_out)

    return (wc, wp, wx)


# --------------------------------------------------------------------- forward
def skip_mlp_forward(x, packed, output_activation="tanh"):
    """x: (B, init_size) float32 -> (B, output_size) float32."""
    B = x.shape[0]
    BT = min(512, _round_up(max(B, 1), 8))                 # sublane-aligned batch tile
    B_pad = _round_up(B, BT)

    x_p = jnp.zeros((B_pad, INIT_PAD), jnp.float32)
    x_p = x_p.at[:B, :INIT].set(x.astype(jnp.float32))
    x_p = x_p.at[:, INIT].set(1.0)                         # homogeneous coord -> bias fold

    wc, wp, wx = packed
    const3 = lambda b: (0, 0, 0)

    out = pl.pallas_call(
        functools.partial(_skip_mlp_kernel, output_activation=output_activation),
        out_shape=jax.ShapeDtypeStruct((B_pad, HID_PAD), jnp.float32),
        grid=(B_pad // BT,),
        in_specs=[
            pl.BlockSpec((BT, INIT_PAD), lambda b: (b, 0)),          # x tile
            # weights: constant block index -> loaded once, VMEM-resident
            pl.BlockSpec((NL, HID_PAD, HID_PAD), const3),            # wc (stacked)
            pl.BlockSpec((NL, HID_PAD, HID_PAD), const3),            # wp (stacked)
            pl.BlockSpec((INIT_PAD, XW), lambda b: (0, 0)),          # wx (+ biases)
        ],
        out_specs=pl.BlockSpec((BT, HID_PAD), lambda b: (b, 0)),
        compiler_params=pltpu.CompilerParams(
            dimension_semantics=("parallel",)),            # megacore sharding on v7x
    )(x_p, wc, wp, wx)

    return out[:B, :OUT]


# ----------------------------------------------------------- pure-JAX reference
def reference_forward(x, params, output_activation="tanh"):
    (w_in, b_in), hidden, (w_out, b_out) = params
    cur = _leaky(x @ w_in.T + b_in)
    prev = jnp.zeros((x.shape[0], 0), x.dtype)
    for (w, b) in hidden:
        combined = jnp.concatenate([cur, prev, x], axis=1)
        prev = cur
        cur = _leaky(combined @ w.T + b)
    z = jnp.concatenate([cur, prev, x], axis=1) @ w_out.T + b_out
    if output_activation == "sigmoid":
        return 1.0 / (1.0 + jnp.exp(-z))
    return (jnp.tanh(z) + 1.0) / 2.0


if __name__ == "__main__":
    key = jax.random.PRNGKey(0)
    k_x, k_p = jax.random.split(key)

    params = init_params(k_p)
    packed = pack_params(params)

    B = 8
    x = jax.random.normal(k_x, (B, INIT), dtype=jnp.float32)

    fwd = jax.jit(skip_mlp_forward)
    y = fwd(x, packed)
    jax.block_until_ready(y)

    assert y.shape == (B, OUT), y.shape
    assert bool(jnp.all(jnp.isfinite(y)))
    assert bool(jnp.all((y >= 0.0) & (y <= 1.0)))          # (tanh(z)+1)/2 range

    y_ref = reference_forward(x, params)
    max_err = float(jnp.max(jnp.abs(y - y_ref)))
    assert max_err < 5e-2, f"mismatch vs reference: {max_err}"

    print("KERNEL_OK")
</pallas_src>

<mosaic_0001>
module attributes {stable_mosaic.version = 11 : i64} {
  func.func @_skip_mlp_kernel(%arg0: i32, %arg1: memref<8x8xf32, #tpu.memory_space<vmem>>, %arg2: memref<8x128x128xf32, #tpu.memory_space<vmem>>, %arg3: memref<8x128x128xf32, #tpu.memory_space<vmem>>, %arg4: memref<8x1152xf32, #tpu.memory_space<vmem>>, %arg5: memref<8x128xf32, #tpu.memory_space<vmem>>) attributes {dimension_semantics = [#tpu.dimension_semantics<parallel>], iteration_bounds = array<i64: 1>, scalar_prefetch = 0 : i64, scratch_operands = 0 : i64, tpu.core_type = #tpu.core_type<tc>, window_params = [{transform_indices = @transform_0, window_bounds = array<i64: 8, 8>}, {pipeline_mode = #tpu.pipeline_mode<synchronous>, transform_indices = @transform_1, window_bounds = array<i64: 8, 128, 128>}, {pipeline_mode = #tpu.pipeline_mode<synchronous>, transform_indices = @transform_2, window_bounds = array<i64: 8, 128, 128>}, {pipeline_mode = #tpu.pipeline_mode<synchronous>, transform_indices = @transform_3, window_bounds = array<i64: 8, 1152>}, {transform_indices = @transform_4, window_bounds = array<i64: 8, 128>}]} {
    %c0 = arith.constant 0 : index
    %c0_0 = arith.constant 0 : index
    %0 = vector.load %arg1[%c0, %c0_0] : memref<8x8xf32, #tpu.memory_space<vmem>>, vector<8x8xf32>
    %c0_1 = arith.constant 0 : index
    %c0_2 = arith.constant 0 : index
    %1 = vector.load %arg4[%c0_1, %c0_2] : memref<8x1152xf32, #tpu.memory_space<vmem>>, vector<8x1152xf32>
    %cst = arith.constant dense<0.000000e+00> : vector<8x1152xf32>
    %2 = tpu.matmul %0, %1, %cst {dimension_numbers = #tpu.dot_dimension_numbers<[1], [0], [0], [1], [0, 0, 1, 1], [], []>} : vector<8x8xf32>, vector<8x1152xf32>, vector<8x1152xf32> -> vector<8x1152xf32>
    %3 = vector.extract_strided_slice %2 {offsets = [0, 0], sizes = [8, 128], strides = [1, 1]} : vector<8x1152xf32> to vector<8x128xf32>
    %cst_3 = arith.constant 0.000000e+00 : f32
    %4 = vector.broadcast %cst_3 : f32 to vector<8x128xf32>
    %5 = arith.cmpf ogt, %3, %4 : vector<8x128xf32>
    %cst_4 = arith.constant 0.00999999977 : f32
    %6 = vector.broadcast %cst_4 : f32 to vector<8x128xf32>
    %7 = arith.mulf %6, %3 : vector<8x128xf32>
    %8 = arith.select %5, %3, %7 : vector<8x128xi1>, vector<8x128xf32>
    %c0_5 = arith.constant 0 : index
    %c0_6 = arith.constant 0 : index
    %c0_7 = arith.constant 0 : index
    %9 = vector.load %arg2[%c0_5, %c0_6, %c0_7] : memref<8x128x128xf32, #tpu.memory_space<vmem>>, vector<1x128x128xf32>
    %10 = vector.shape_cast %9 : vector<1x128x128xf32> to vector<128x128xf32>
    %cst_8 = arith.constant dense<0.000000e+00> : vector<8x128xf32>
    %11 = tpu.matmul %8, %10, %cst_8 {dimension_numbers = #tpu.dot_dimension_numbers<[1], [0], [0], [1], [0, 0, 1, 1], [], []>} : vector<8x128xf32>, vector<128x128xf32>, vector<8x128xf32> -> vector<8x128xf32>
    %12 = vector.extract_strided_slice %2 {offsets = [0, 128], sizes = [8, 128], strides = [1, 1]} : vector<8x1152xf32> to vector<8x128xf32>
    %13 = arith.addf %11, %12 : vector<8x128xf32>
    %cst_9 = arith.constant 0.000000e+00 : f32
    %14 = vector.broadcast %cst_9 : f32 to vector<8x128xf32>
    %15 = arith.cmpf ogt, %13, %14 : vector<8x128xf32>
    %cst_10 = arith.constant 0.00999999977 : f32
    %16 = vector.broadcast %cst_10 : f32 to vector<8x128xf32>
    %17 = arith.mulf %16, %13 : vector<8x128xf32>
    %18 = arith.select %15, %13, %17 : vector<8x128xi1>, vector<8x128xf32>
    %c1 = arith.constant 1 : index
    %c0_11 = arith.constant 0 : index
    %c0_12 = arith.constant 0 : index
    %19 = vector.load %arg2[%c1, %c0_11, %c0_12] : memref<8x128x128xf32, #tpu.memory_space<vmem>>, vector<1x128x128xf32>
    %20 = vector.shape_cast %19 : vector<1x128x128xf32> to vector<128x128xf32>
    %cst_13 = arith.constant dense<0.000000e+00> : vector<8x128xf32>
    %21 = tpu.matmul %18, %20, %cst_13 {dimension_numbers = #tpu.dot_dimension_numbers<[1], [0], [0], [1], [0, 0, 1, 1], [], []>} : vector<8x128xf32>, vector<128x128xf32>, vector<8x128xf32> -> vector<8x128xf32>
    %22 = vector.extract_strided_slice %2 {offsets = [0, 256], sizes = [8, 128], strides = [1, 1]} : vector<8x1152xf32> to vector<8x128xf32>
    %23 = arith.addf %21, %22 : vector<8x128xf32>
    %c1_14 = arith.constant 1 : index
    %c0_15 = arith.constant 0 : index
    %c0_16 = arith.constant 0 : index
    %24 = vector.load %arg3[%c1_14, %c0_15, %c0_16] : memref<8x128x128xf32, #tpu.memory_space<vmem>>, vector<1x128x128xf32>
    %25 = vector.shape_cast %24 : vector<1x128x128xf32> to vector<128x128xf32>
    %cst_17 = arith.constant dense<0.000000e+00> : vector<8x128xf32>
    %26 = tpu.matmul %8, %25, %cst_17 {dimension_numbers = #tpu.dot_dimension_numbers<[1], [0], [0], [1], [0, 0, 1, 1], [], []>} : vector<8x128xf32>, vector<128x128xf32>, vector<8x128xf32> -> vector<8x128xf32>
    %27 = arith.addf %23, %26 : vector<8x128xf32>
    %cst_18 = arith.constant 0.000000e+00 : f32
    %28 = vector.broadcast %cst_18 : f32 to vector<8x128xf32>
    %29 = arith.cmpf ogt, %27, %28 : vector<8x128xf32>
    %cst_19 = arith.constant 0.00999999977 : f32
    %30 = vector.broadcast %cst_19 : f32 to vector<8x128xf32>
    %31 = arith.mulf %30, %27 : vector<8x128xf32>
    %32 = arith.select %29, %27, %31 : vector<8x128xi1>, vector<8x128xf32>
    %c2 = arith.constant 2 : index
    %c0_20 = arith.constant 0 : index
    %c0_21 = arith.constant 0 : index
    %33 = vector.load %arg2[%c2, %c0_20, %c0_21] : memref<8x128x128xf32, #tpu.memory_space<vmem>>, vector<1x128x128xf32>
    %34 = vector.shape_cast %33 : vector<1x128x128xf32> to vector<128x128xf32>
    %cst_22 = arith.constant dense<0.000000e+00> : vector<8x128xf32>
    %35 = tpu.matmul %32, %34, %cst_22 {dimension_numbers = #tpu.dot_dimension_numbers<[1], [0], [0], [1], [0, 0, 1, 1], [], []>} : vector<8x128xf32>, vector<128x128xf32>, vector<8x128xf32> -> vector<8x128xf32>
    %36 = vector.extract_strided_slice %2 {offsets = [0, 384], sizes = [8, 128], strides = [1, 1]} : vector<8x1152xf32> to vector<8x128xf32>
    %37 = arith.addf %35, %36 : vector<8x128xf32>
    %c2_23 = arith.constant 2 : index
    %c0_24 = arith.constant 0 : index
    %c0_25 = arith.constant 0 : index
    %38 = vector.load %arg3[%c2_23, %c0_24, %c0_25] : memref<8x128x128xf32, #tpu.memory_space<vmem>>, vector<1x128x128xf32>
    %39 = vector.shape_cast %38 : vector<1x128x128xf32> to vector<128x128xf32>
    %cst_26 = arith.constant dense<0.000000e+00> : vector<8x128xf32>
    %40 = tpu.matmul %18, %39, %cst_26 {dimension_numbers = #tpu.dot_dimension_numbers<[1], [0], [0], [1], [0, 0, 1, 1], [], []>} : vector<8x128xf32>, vector<128x128xf32>, vector<8x128xf32> -> vector<8x128xf32>
    %41 = arith.addf %37, %40 : vector<8x128xf32>
    %cst_27 = arith.constant 0.000000e+00 : f32
    %42 = vector.broadcast %cst_27 : f32 to vector<8x128xf32>
    %43 = arith.cmpf ogt, %41, %42 : vector<8x128xf32>
    %cst_28 = arith.constant 0.00999999977 : f32
    %44 = vector.broadcast %cst_28 : f32 to vector<8x128xf32>
    %45 = arith.mulf %44, %41 : vector<8x128xf32>
    %46 = arith.select %43, %41, %45 : vector<8x128xi1>, vector<8x128xf32>
    %c3 = arith.constant 3 : index
    %c0_29 = arith.constant 0 : index
    %c0_30 = arith.constant 0 : index
    %47 = vector.load %arg2[%c3, %c0_29, %c0_30] : memref<8x128x128xf32, #tpu.memory_space<vmem>>, vector<1x128x128xf32>
    %48 = vector.shape_cast %47 : vector<1x128x128xf32> to vector<128x128xf32>
    %cst_31 = arith.constant dense<0.000000e+00> : vector<8x128xf32>
    %49 = tpu.matmul %46, %48, %cst_31 {dimension_numbers = #tpu.dot_dimension_numbers<[1], [0], [0], [1], [0, 0, 1, 1], [], []>} : vector<8x128xf32>, vector<128x128xf32>, vector<8x128xf32> -> vector<8x128xf32>
    %50 = vector.extract_strided_slice %2 {offsets = [0, 512], sizes = [8, 128], strides = [1, 1]} : vector<8x1152xf32> to vector<8x128xf32>
    %51 = arith.addf %49, %50 : vector<8x128xf32>
    %c3_32 = arith.constant 3 : index
    %c0_33 = arith.constant 0 : index
    %c0_34 = arith.constant 0 : index
    %52 = vector.load %arg3[%c3_32, %c0_33, %c0_34] : memref<8x128x128xf32, #tpu.memory_space<vmem>>, vector<1x128x128xf32>
    %53 = vector.shape_cast %52 : vector<1x128x128xf32> to vector<128x128xf32>
    %cst_35 = arith.constant dense<0.000000e+00> : vector<8x128xf32>
    %54 = tpu.matmul %32, %53, %cst_35 {dimension_numbers = #tpu.dot_dimension_numbers<[1], [0], [0], [1], [0, 0, 1, 1], [], []>} : vector<8x128xf32>, vector<128x128xf32>, vector<8x128xf32> -> vector<8x128xf32>
    %55 = arith.addf %51, %54 : vector<8x128xf32>
    %cst_36 = arith.constant 0.000000e+00 : f32
    %56 = vector.broadcast %cst_36 : f32 to vector<8x128xf32>
    %57 = arith.cmpf ogt, %55, %56 : vector<8x128xf32>
    %cst_37 = arith.constant 0.00999999977 : f32
    %58 = vector.broadcast %cst_37 : f32 to vector<8x128xf32>
    %59 = arith.mulf %58, %55 : vector<8x128xf32>
    %60 = arith.select %57, %55, %59 : vector<8x128xi1>, vector<8x128xf32>
    %c4 = arith.constant 4 : index
    %c0_38 = arith.constant 0 : index
    %c0_39 = arith.constant 0 : index
    %61 = vector.load %arg2[%c4, %c0_38, %c0_39] : memref<8x128x128xf32, #tpu.memory_space<vmem>>, vector<1x128x128xf32>
    %62 = vector.shape_cast %61 : vector<1x128x128xf32> to vector<128x128xf32>
    %cst_40 = arith.constant dense<0.000000e+00> : vector<8x128xf32>
    %63 = tpu.matmul %60, %62, %cst_40 {dimension_numbers = #tpu.dot_dimension_numbers<[1], [0], [0], [1], [0, 0, 1, 1], [], []>} : vector<8x128xf32>, vector<128x128xf32>, vector<8x128xf32> -> vector<8x128xf32>
    %64 = vector.extract_strided_slice %2 {offsets = [0, 640], sizes = [8, 128], strides = [1, 1]} : vector<8x1152xf32> to vector<8x128xf32>
    %65 = arith.addf %63, %64 : vector<8x128xf32>
    %c4_41 = arith.constant 4 : index
    %c0_42 = arith.constant 0 : index
    %c0_43 = arith.constant 0 : index
    %66 = vector.load %arg3[%c4_41, %c0_42, %c0_43] : memref<8x128x128xf32, #tpu.memory_space<vmem>>, vector<1x128x128xf32>
    %67 = vector.shape_cast %66 : vector<1x128x128xf32> to vector<128x128xf32>
    %cst_44 = arith.constant dense<0.000000e+00> : vector<8x128xf32>
    %68 = tpu.matmul %46, %67, %cst_44 {dimension_numbers = #tpu.dot_dimension_numbers<[1], [0], [0], [1], [0, 0, 1, 1], [], []>} : vector<8x128xf32>, vector<128x128xf32>, vector<8x128xf32> -> vector<8x128xf32>
    %69 = arith.addf %65, %68 : vector<8x128xf32>
    %cst_45 = arith.constant 0.000000e+00 : f32
    %70 = vector.broadcast %cst_45 : f32 to vector<8x128xf32>
    %71 = arith.cmpf ogt, %69, %70 : vector<8x128xf32>
    %cst_46 = arith.constant 0.00999999977 : f32
    %72 = vector.broadcast %cst_46 : f32 to vector<8x128xf32>
    %73 = arith.mulf %72, %69 : vector<8x128xf32>
    %74 = arith.select %71, %69, %73 : vector<8x128xi1>, vector<8x128xf32>
    %c5 = arith.constant 5 : index
    %c0_47 = arith.constant 0 : index
    %c0_48 = arith.constant 0 : index
    %75 = vector.load %arg2[%c5, %c0_47, %c0_48] : memref<8x128x128xf32, #tpu.memory_space<vmem>>, vector<1x128x128xf32>
    %76 = vector.shape_cast %75 : vector<1x128x128xf32> to vector<128x128xf32>
    %cst_49 = arith.constant dense<0.000000e+00> : vector<8x128xf32>
    %77 = tpu.matmul %74, %76, %cst_49 {dimension_numbers = #tpu.dot_dimension_numbers<[1], [0], [0], [1], [0, 0, 1, 1], [], []>} : vector<8x128xf32>, vector<128x128xf32>, vector<8x128xf32> -> vector<8x128xf32>
    %78 = vector.extract_strided_slice %2 {offsets = [0, 768], sizes = [8, 128], strides = [1, 1]} : vector<8x1152xf32> to vector<8x128xf32>
    %79 = arith.addf %77, %78 : vector<8x128xf32>
    %c5_50 = arith.constant 5 : index
    %c0_51 = arith.constant 0 : index
    %c0_52 = arith.constant 0 : index
    %80 = vector.load %arg3[%c5_50, %c0_51, %c0_52] : memref<8x128x128xf32, #tpu.memory_space<vmem>>, vector<1x128x128xf32>
    %81 = vector.shape_cast %80 : vector<1x128x128xf32> to vector<128x128xf32>
    %cst_53 = arith.constant dense<0.000000e+00> : vector<8x128xf32>
    %82 = tpu.matmul %60, %81, %cst_53 {dimension_numbers = #tpu.dot_dimension_numbers<[1], [0], [0], [1], [0, 0, 1, 1], [], []>} : vector<8x128xf32>, vector<128x128xf32>, vector<8x128xf32> -> vector<8x128xf32>
    %83 = arith.addf %79, %82 : vector<8x128xf32>
    %cst_54 = arith.constant 0.000000e+00 : f32
    %84 = vector.broadcast %cst_54 : f32 to vector<8x128xf32>
    %85 = arith.cmpf ogt, %83, %84 : vector<8x128xf32>
    %cst_55 = arith.constant 0.00999999977 : f32
    %86 = vector.broadcast %cst_55 : f32 to vector<8x128xf32>
    %87 = arith.mulf %86, %83 : vector<8x128xf32>
    %88 = arith.select %85, %83, %87 : vector<8x128xi1>, vector<8x128xf32>
    %c6 = arith.constant 6 : index
    %c0_56 = arith.constant 0 : index
    %c0_57 = arith.constant 0 : index
    %89 = vector.load %arg2[%c6, %c0_56, %c0_57] : memref<8x128x128xf32, #tpu.memory_space<vmem>>, vector<1x128x128xf32>
    %90 = vector.shape_cast %89 : vector<1x128x128xf32> to vector<128x128xf32>
    %cst_58 = arith.constant dense<0.000000e+00> : vector<8x128xf32>
    %91 = tpu.matmul %88, %90, %cst_58 {dimension_numbers = #tpu.dot_dimension_numbers<[1], [0], [0], [1], [0, 0, 1, 1], [], []>} : vector<8x128xf32>, vector<128x128xf32>, vector<8x128xf32> -> vector<8x128xf32>
    %92 = vector.extract_strided_slice %2 {offsets = [0, 896], sizes = [8, 128], strides = [1, 1]} : vector<8x1152xf32> to vector<8x128xf32>
    %93 = arith.addf %91, %92 : vector<8x128xf32>
    %c6_59 = arith.constant 6 : index
    %c0_60 = arith.constant 0 : index
    %c0_61 = arith.constant 0 : index
    %94 = vector.load %arg3[%c6_59, %c0_60, %c0_61] : memref<8x128x128xf32, #tpu.memory_space<vmem>>, vector<1x128x128xf32>
    %95 = vector.shape_cast %94 : vector<1x128x128xf32> to vector<128x128xf32>
    %cst_62 = arith.constant dense<0.000000e+00> : vector<8x128xf32>
    %96 = tpu.matmul %74, %95, %cst_62 {dimension_numbers = #tpu.dot_dimension_numbers<[1], [0], [0], [1], [0, 0, 1, 1], [], []>} : vector<8x128xf32>, vector<128x128xf32>, vector<8x128xf32> -> vector<8x128xf32>
    %97 = arith.addf %93, %96 : vector<8x128xf32>
    %cst_63 = arith.constant 0.000000e+00 : f32
    %98 = vector.broadcast %cst_63 : f32 to vector<8x128xf32>
    %99 = arith.cmpf ogt, %97, %98 : vector<8x128xf32>
    %cst_64 = arith.constant 0.00999999977 : f32
    %100 = vector.broadcast %cst_64 : f32 to vector<8x128xf32>
    %101 = arith.mulf %100, %97 : vector<8x128xf32>
    %102 = arith.select %99, %97, %101 : vector<8x128xi1>, vector<8x128xf32>
    %c7 = arith.constant 7 : index
    %c0_65 = arith.constant 0 : index
    %c0_66 = arith.constant 0 : index
    %103 = vector.load %arg2[%c7, %c0_65, %c0_66] : memref<8x128x128xf32, #tpu.memory_space<vmem>>, vector<1x128x128xf32>
    %104 = vector.shape_cast %103 : vector<1x128x128xf32> to vector<128x128xf32>
    %cst_67 = arith.constant dense<0.000000e+00> : vector<8x128xf32>
    %105 = tpu.matmul %102, %104, %cst_67 {dimension_numbers = #tpu.dot_dimension_numbers<[1], [0], [0], [1], [0, 0, 1, 1], [], []>} : vector<8x128xf32>, vector<128x128xf32>, vector<8x128xf32> -> vector<8x128xf32>
    %c7_68 = arith.constant 7 : index
    %c0_69 = arith.constant 0 : index
    %c0_70 = arith.constant 0 : index
    %106 = vector.load %arg3[%c7_68, %c0_69, %c0_70] : memref<8x128x128xf32, #tpu.memory_space<vmem>>, vector<1x128x128xf32>
    %107 = vector.shape_cast %106 : vector<1x128x128xf32> to vector<128x128xf32>
    %cst_71 = arith.constant dense<0.000000e+00> : vector<8x128xf32>
    %108 = tpu.matmul %88, %107, %cst_71 {dimension_numbers = #tpu.dot_dimension_numbers<[1], [0], [0], [1], [0, 0, 1, 1], [], []>} : vector<8x128xf32>, vector<128x128xf32>, vector<8x128xf32> -> vector<8x128xf32>
    %109 = arith.addf %105, %108 : vector<8x128xf32>
    %110 = vector.extract_strided_slice %2 {offsets = [0, 1024], sizes = [8, 128], strides = [1, 1]} : vector<8x1152xf32> to vector<8x128xf32>
    %111 = arith.addf %109, %110 : vector<8x128xf32>
    %112 = math.tanh %111 : vector<8x128xf32>
    %cst_72 = arith.constant 1.000000e+00 : f32
    %113 = vector.broadcast %cst_72 : f32 to vector<8x128xf32>
    %114 = arith.addf %112, %113 : vector<8x128xf32>
    %cst_73 = arith.constant 5.000000e-01 : f32
    %115 = vector.broadcast %cst_73 : f32 to vector<8x128xf32>
    %116 = arith.mulf %115, %114 : vector<8x128xf32>
    %c0_74 = arith.constant 0 : index
    %c0_75 = arith.constant 0 : index
    %117 = vector.load %arg5[%c0_74, %c0_75] : memref<8x128xf32, #tpu.memory_space<vmem>>, vector<8x128xf32>
    tpu.vector_store %arg5[%c0_74, %c0_75], %116 {strides = array<i32>} : memref<8x128xf32, #tpu.memory_space<vmem>>, vector<8x128xf32>,
    return
  }
  func.func @transform_0(%arg0: i32) -> (i32, i32) {
    %c0_i32 = arith.constant 0 : i32
    %c0_i32_0 = arith.constant 0 : i32
    return %arg0, %c0_i32 : i32, i32
  }
  func.func @transform_1(%arg0: i32) -> (i32, i32, i32) {
    %c0_i32 = arith.constant 0 : i32
    %c0_i32_0 = arith.constant 0 : i32
    %c0_i32_1 = arith.constant 0 : i32
    %c0_i32_2 = arith.constant 0 : i32
    return %c0_i32, %c0_i32_0, %c0_i32_1 : i32, i32, i32
  }
  func.func @transform_2(%arg0: i32) -> (i32, i32, i32) {
    %c0_i32 = arith.constant 0 : i32
    %c0_i32_0 = arith.constant 0 : i32
    %c0_i32_1 = arith.constant 0 : i32
    %c0_i32_2 = arith.constant 0 : i32
    return %c0_i32, %c0_i32_0, %c0_i32_1 : i32, i32, i32
  }
  func.func @transform_3(%arg0: i32) -> (i32, i32) {
    %c0_i32 = arith.constant 0 : i32
    %c0_i32_0 = arith.constant 0 : i32
    %c0_i32_1 = arith.constant 0 : i32
    return %c0_i32, %c0_i32_0 : i32, i32
  }
  func.func @transform_4(%arg0: i32) -> (i32, i32) {
    %c0_i32 = arith.constant 0 : i32
    %c0_i32_0 = arith.constant 0 : i32
    return %arg0, %c0_i32 : i32, i32
  }
}

</mosaic_0001>

<llo_original>
// kernel: skip_mlp_forward.1
$region0: #{skip_mlp_forward.1}
  #allocation0 [shape = 'u32[]', space=smem, size = 0x4, offset = 0x4, fixed_abs, tag = 'smem constant byte address 0x4 - core index']
  #allocation1 [shape = 'u32[144,128]{1,0:T(1,128)}', space=vmem, size = 0x12000, scoped, tag = 'internal scratch']
  %s0 = inlined_call_operand.vmem [shape: f32[8,8], index: 0, kind: input, shape index: {}]
  %s1 = inlined_call_operand.hbm [shape: f32[8,128,128], index: 1, kind: input, shape index: {}]
  %s2 = inlined_call_operand.hbm [shape: f32[8,128,128], index: 2, kind: input, shape index: {}]
  %s3 = inlined_call_operand.vmem [shape: f32[8,1152], index: 3, kind: input, shape index: {}]
  %s4 = inlined_call_operand.vmem [shape: f32[8,128], index: 4, kind: output, shape index: {}]
  %s5 = sld [smem:[#allocation0]]
  $region34: #{skip_mlp_forward.1} parent=0
    _
  %s7 = ssub.s32 1, %s5
  %s8 = scalar_select 0, %s7, %s5
  $region1: #{skip_mlp_forward.1} parent=0
    #allocation2 [shape = 'u8[524288]{0}', space=vmem, size = 0x80000, scoped, tag = 'input window, operand 1, single buffered']
    #allocation3 [shape = 's32[1]{0}', space=sflag, size = 0x4, scoped, tag = 'scoped memory for skip_mlp_forward.1']
    #allocation4 [shape = 'u8[524288]{0}', space=vmem, size = 0x80000, scoped, tag = 'input window, operand 2, single buffered']
    #allocation5 [shape = 's32[1]{0}', space=sflag, size = 0x4, scoped, tag = 'scoped memory for skip_mlp_forward.1']
    %9 = vsyncpa [#allocation3], 0
    %10 = vsyncpa [#allocation5], 0
    // Predicated region
    $region2: #{skip_mlp_forward.1} parent=1 // pred_check
      _
    $region3: #{skip_mlp_forward.1} parent=1 // pred_check_branch
      %12 = sbr.rel (0) target = $region5
    $region4: #{skip_mlp_forward.1} parent=1 // pred_region
      _
    $region5: #{skip_mlp_forward.1} parent=1 // pred_fallthru
      _
    // Predicated region
    $region6: #{skip_mlp_forward.1} parent=1 // pred_check
      _
    $region7: #{skip_mlp_forward.1} parent=1 // pred_check_branch
      %14 = sbr.rel (0) target = $region9
    $region8: #{skip_mlp_forward.1} parent=1 // pred_region
      %s16 = ssub.s32 16384, 16384
      %17 = vsyncadd [#allocation3], %s16
      %s18 = sshll.u32 [#allocation2], 4
      %s19 = int_to_ptr.vmem [resolvable:$true] %s18
      %24 = dma.hbm_to_vmem [thread:$0]  %s1, 16384, %s19, [#allocation3], 128, 128, 8
    $region9: #{skip_mlp_forward.1} parent=1 // pred_fallthru
      _
    // Predicated region
    $region10: #{skip_mlp_forward.1} parent=1 // pred_check
      _
    $region11: #{skip_mlp_forward.1} parent=1 // pred_check_branch
      %26 = sbr.rel (0) target = $region13
    $region12: #{skip_mlp_forward.1} parent=1 // pred_region
      %s28 = ssub.s32 16384, 16384
      %29 = vsyncadd [#allocation5], %s28
      %s30 = sshll.u32 [#allocation4], 4
      %s31 = int_to_ptr.vmem [resolvable:$true] %s30
      %36 = dma.hbm_to_vmem [thread:$0]  %s2, 16384, %s31, [#allocation5], 128, 128, 8
    $region13: #{skip_mlp_forward.1} parent=1 // pred_fallthru
      _
    // Predicated region
    $region14: #{skip_mlp_forward.1} parent=1 // pred_check
      _
    $region15: #{skip_mlp_forward.1} parent=1 // pred_check_branch
      %38 = sbr.rel (0) target = $region17
    $region16: #{skip_mlp_forward.1} parent=1 // pred_region
      _
    $region17: #{skip_mlp_forward.1} parent=1 // pred_fallthru
      _
    // Predicated region
    $region18: #{skip_mlp_forward.1} parent=1 // pred_check
      _
    $region19: #{skip_mlp_forward.1} parent=1 // pred_check_branch
      %40 = sbr.rel (0) target = $region21
    $region20: #{skip_mlp_forward.1} parent=1 // pred_region
      %41 = dma.done [#allocation3], 16384
    $region21: #{skip_mlp_forward.1} parent=1 // pred_fallthru
      _
    // Predicated region
    $region22: #{skip_mlp_forward.1} parent=1 // pred_check
      _
    $region23: #{skip_mlp_forward.1} parent=1 // pred_check_branch
      %43 = sbr.rel (0) target = $region25
    $region24: #{skip_mlp_forward.1} parent=1 // pred_region
      %44 = dma.done [#allocation5], 16384
    $region25: #{skip_mlp_forward.1} parent=1 // pred_fallthru
      _
    %v45 = vld [vmem:[%s0] sm:$0xff]
    %v46 = vld [vmem:[%s3] sm:$0xff]
    %v47 = vld [vmem:[%s3 + $0x8] sm:$0xff]
    %v48 = vld [vmem:[%s3 + $0x10] sm:$0xff]
    %v49 = vld [vmem:[%s3 + $0x18] sm:$0xff]
    %v50 = vld [vmem:[%s3 + $0x20] sm:$0xff]
    %v51 = vld [vmem:[%s3 + $0x28] sm:$0xff]
    %v52 = vld [vmem:[%s3 + $0x30] sm:$0xff]
    %v53 = vld [vmem:[%s3 + $0x38] sm:$0xff]
    %v54 = vld [vmem:[%s3 + $0x40] sm:$0xff]
    %vm55 = vcmask 64512
    %v57 = vsel %vm55, %v45, 0
    %59 = vmatprep.subr.mxu0 %v47
    %60 = vmatpush1.msra.mxu0 %v46
    %61 = vmatprep.subr.mxu0 0.0
    %62 = vmatpush1.msra.mxu0 0.0
    %63 = vmatprep.subr.mxu0 0.0
    %64 = vmatpush1.msra.mxu0 0.0
    %65 = vmatprep.subr.mxu0 0.0
    %66 = vmatpush1.msra.mxu0 0.0
    %67 = vmatprep.subr.mxu0 0.0
    %68 = vmatpush1.msra.mxu0 0.0
    %69 = vmatprep.subr.mxu0 0.0
    %70 = vmatpush1.msra.mxu0 0.0
    %71 = vmatprep.subr.mxu0 0.0
    %72 = vmatpush1.msra.mxu0 0.0
    %73 = vmatprep.subr.mxu0 0.0
    %74 = vmatpush1.msra.mxu0 0.0
    %75 = vmatprep.subr.mxu0 0.0
    %76 = vmatpush1.msra.mxu0 0.0
    %77 = vmatprep.subr.mxu0 0.0
    %78 = vmatpush1.msra.mxu0 0.0
    %79 = vmatprep.subr.mxu0 0.0
    %80 = vmatpush1.msra.mxu0 0.0
    %81 = vmatprep.subr.mxu0 0.0
    %82 = vmatpush1.msra.mxu0 0.0
    %83 = vmatprep.subr.mxu0 0.0
    %84 = vmatpush1.msra.mxu0 0.0
    %85 = vmatprep.subr.mxu0 0.0
    %86 = vmatpush1.msra.mxu0 0.0
    %87 = vmatprep.subr.mxu0 0.0
    %88 = vmatpush1.msra.mxu0 0.0
    %89 = vmatprep.subr.mxu0 0.0
    %90 = vmatpush1.msra.mxu0 0.0
    %91 = vmatprep.subr.mxu0 0.0
    %92 = vmatpush1.msra.mxu0 0.0
    %93 = vmatprep.subr.mxu0 0.0
    %94 = vmatpush1.msra.mxu0 0.0
    %95 = vmatprep.subr.mxu0 0.0
    %96 = vmatpush1.msra.mxu0 0.0
    %97 = vmatprep.subr.mxu0 0.0
    %98 = vmatpush1.msra.mxu0 0.0
    %99 = vmatprep.subr.mxu0 0.0
    %100 = vmatpush1.msra.mxu0 0.0
    %101 = vmatprep.subr.mxu0 0.0
    %102 = vmatpush1.msra.mxu0 0.0
    %103 = vmatprep.subr.mxu0 0.0
    %104 = vmatpush1.msra.mxu0 0.0
    %105 = vmatprep.subr.mxu0 0.0
    %106 = vmatpush1.msra.mxu0 0.0
    %107 = vmatprep.subr.mxu0 0.0
    %108 = vmatpush1.msra.mxu0 0.0
    %109 = vmatprep.subr.mxu0 0.0
    %110 = vmatpush1.msra.mxu0 0.0
    %111 = vmatprep.subr.mxu0 0.0
    %112 = vmatpush1.msra.mxu0 0.0
    %113 = vmatprep.subr.mxu0 0.0
    %114 = vmatpush1.msra.mxu0 0.0
    %115 = vmatprep.subr.mxu0 0.0
    %116 = vmatpush1.msra.mxu0 0.0
    %117 = vmatprep.subr.mxu0 0.0
    %118 = vmatpush1.msra.mxu0 0.0
    %119 = vmatprep.subr.mxu0 0.0
    %120 = vmatpush1.msra.mxu0 0.0
    %121 = vmatprep.subr.mxu0 0.0
    %122 = vmatpush1.msra.mxu0 0.0
    %123 = vmatprep.mubr.f32.mxu0 0.0
    %124 = vmatmul.mubr.f32.gmra.mrb[0].mxu0 %v57
    %v125 = vpop.f32.mrb[0].mxu0
    %v126 = vadd.f32 0.0, %v125
    %v127 = vpop.f32.mrb[0].mxu0
    %v128 = vadd.f32 0.0, %v127
    %129 = vdwg.mxu0
    %130 = vmatprep.subr.mxu0 %v49
    %131 = vmatpush1.msra.mxu0 %v48
    %132 = vmatprep.subr.mxu0 0.0
    %133 = vmatpush1.msra.mxu0 0.0
    %134 = vmatprep.subr.mxu0 0.0
    %135 = vmatpush1.msra.mxu0 0.0
    %136 = vmatprep.subr.mxu0 0.0
    %137 = vmatpush1.msra.mxu0 0.0
    %138 = vmatprep.subr.mxu0 0.0
    %139 = vmatpush1.msra.mxu0 0.0
    %140 = vmatprep.subr.mxu0 0.0
    %141 = vmatpush1.msra.mxu0 0.0
    %142 = vmatprep.subr.mxu0 0.0
    %143 = vmatpush1.msra.mxu0 0.0
    %144 = vmatprep.subr.mxu0 0.0
    %145 = vmatpush1.msra.mxu0 0.0
    %146 = vmatprep.subr.mxu0 0.0
    %147 = vmatpush1.msra.mxu0 0.0
    %148 = vmatprep.subr.mxu0 0.0
    %149 = vmatpush1.msra.mxu0 0.0
    %150 = vmatprep.subr.mxu0 0.0
    %151 = vmatpush1.msra.mxu0 0.0
    %152 = vmatprep.subr.mxu0 0.0
    %153 = vmatpush1.msra.mxu0 0.0
    %154 = vmatprep.subr.mxu0 0.0
    %155 = vmatpush1.msra.mxu0 0.0
    %156 = vmatprep.subr.mxu0 0.0
    %157 = vmatpush1.msra.mxu0 0.0
    %158 = vmatprep.subr.mxu0 0.0
    %159 = vmatpush1.msra.mxu0 0.0
    %160 = vmatprep.subr.mxu0 0.0
    %161 = vmatpush1.msra.mxu0 0.0
    %162 = vmatprep.subr.mxu0 0.0
    %163 = vmatpush1.msra.mxu0 0.0
    %164 = vmatprep.subr.mxu0 0.0
    %165 = vmatpush1.msra.mxu0 0.0
    %166 = vmatprep.subr.mxu0 0.0
    %167 = vmatpush1.msra.mxu0 0.0
    %168 = vmatprep.subr.mxu0 0.0
    %169 = vmatpush1.msra.mxu0 0.0
    %170 = vmatprep.subr.mxu0 0.0
    %171 = vmatpush1.msra.mxu0 0.0
    %172 = vmatprep.subr.mxu0 0.0
    %173 = vmatpush1.msra.mxu0 0.0
    %174 = vmatprep.subr.mxu0 0.0
    %175 = vmatpush1.msra.mxu0 0.0
    %176 = vmatprep.subr.mxu0 0.0
    %177 = vmatpush1.msra.mxu0 0.0
    %178 = vmatprep.subr.mxu0 0.0
    %179 = vmatpush1.msra.mxu0 0.0
    %180 = vmatprep.subr.mxu0 0.0
    %181 = vmatpush1.msra.mxu0 0.0
    %182 = vmatprep.subr.mxu0 0.0
    %183 = vmatpush1.msra.mxu0 0.0
    %184 = vmatprep.subr.mxu0 0.0
    %185 = vmatpush1.msra.mxu0 0.0
    %186 = vmatprep.subr.mxu0 0.0
    %187 = vmatpush1.msra.mxu0 0.0
    %188 = vmatprep.subr.mxu0 0.0
    %189 = vmatpush1.msra.mxu0 0.0
    %190 = vmatprep.subr.mxu0 0.0
    %191 = vmatpush1.msra.mxu0 0.0
    %192 = vmatprep.subr.mxu0 0.0
    %193 = vmatpush1.msra.mxu0 0.0
    %194 = vmatprep.mubr.f32.mxu0 0.0
    %195 = vmatmul.mubr.f32.gmra.mrb[0].mxu0 %v57
    %v196 = vpop.f32.mrb[0].mxu0
    %v197 = vadd.f32 0.0, %v196
    %v198 = vpop.f32.mrb[0].mxu0
    %v199 = vadd.f32 0.0, %v198
    %200 = vdwg.mxu0
    %201 = vmatprep.subr.mxu0 %v51
    %202 = vmatpush1.msra.mxu0 %v50
    %203 = vmatprep.subr.mxu0 0.0
    %204 = vmatpush1.msra.mxu0 0.0
    %205 = vmatprep.subr.mxu0 0.0
    %206 = vmatpush1.msra.mxu0 0.0
    %207 = vmatprep.subr.mxu0 0.0
    %208 = vmatpush1.msra.mxu0 0.0
    %209 = vmatprep.subr.mxu0 0.0
    %210 = vmatpush1.msra.mxu0 0.0
    %211 = vmatprep.subr.mxu0 0.0
    %212 = vmatpush1.msra.mxu0 0.0
    %213 = vmatprep.subr.mxu0 0.0
    %214 = vmatpush1.msra.mxu0 0.0
    %215 = vmatprep.subr.mxu0 0.0
    %216 = vmatpush1.msra.mxu0 0.0
    %217 = vmatprep.subr.mxu0 0.0
    %218 = vmatpush1.msra.mxu0 0.0
    %219 = vmatprep.subr.mxu0 0.0
    %220 = vmatpush1.msra.mxu0 0.0
    %221 = vmatprep.subr.mxu0 0.0
    %222 = vmatpush1.msra.mxu0 0.0
    %223 = vmatprep.subr.mxu0 0.0
    %224 = vmatpush1.msra.mxu0 0.0
    %225 = vmatprep.subr.mxu0 0.0
    %226 = vmatpush1.msra.mxu0 0.0
    %227 = vmatprep.subr.mxu0 0.0
    %228 = vmatpush1.msra.mxu0 0.0
    %229 = vmatprep.subr.mxu0 0.0
    %230 = vmatpush1.msra.mxu0 0.0
    %231 = vmatprep.subr.mxu0 0.0
    %232 = vmatpush1.msra.mxu0 0.0
    %233 = vmatprep.subr.mxu0 0.0
    %234 = vmatpush1.msra.mxu0 0.0
    %235 = vmatprep.subr.mxu0 0.0
    %236 = vmatpush1.msra.mxu0 0.0
    %237 = vmatprep.subr.mxu0 0.0
    %238 = vmatpush1.msra.mxu0 0.0
    %239 = vmatprep.subr.mxu0 0.0
    %240 = vmatpush1.msra.mxu0 0.0
    %241 = vmatprep.subr.mxu0 0.0
    %242 = vmatpush1.msra.mxu0 0.0
    %243 = vmatprep.subr.mxu0 0.0
    %244 = vmatpush1.msra.mxu0 0.0
    %245 = vmatprep.subr.mxu0 0.0
    %246 = vmatpush1.msra.mxu0 0.0
    %247 = vmatprep.subr.mxu0 0.0
    %248 = vmatpush1.msra.mxu0 0.0
    %249 = vmatprep.subr.mxu0 0.0
    %250 = vmatpush1.msra.mxu0 0.0
    %251 = vmatprep.subr.mxu0 0.0
    %252 = vmatpush1.msra.mxu0 0.0
    %253 = vmatprep.subr.mxu0 0.0
    %254 = vmatpush1.msra.mxu0 0.0
    %255 = vmatprep.subr.mxu0 0.0
    %256 = vmatpush1.msra.mxu0 0.0
    %257 = vmatprep.subr.mxu0 0.0
    %258 = vmatpush1.msra.mxu0 0.0
    %259 = vmatprep.subr.mxu0 0.0
    %260 = vmatpush1.msra.mxu0 0.0
    %261 = vmatprep.subr.mxu0 0.0
    %262 = vmatpush1.msra.mxu0 0.0
    %263 = vmatprep.subr.mxu0 0.0
    %264 = vmatpush1.msra.mxu0 0.0
    %265 = vmatprep.mubr.f32.mxu0 0.0
    %266 = vmatmul.mubr.f32.gmra.mrb[0].mxu0 %v57
    %v267 = vpop.f32.mrb[0].mxu0
    %v268 = vadd.f32 0.0, %v267
    %v269 = vpop.f32.mrb[0].mxu0
    %v270 = vadd.f32 0.0, %v269
    %271 = vdwg.mxu0
    %272 = vmatprep.subr.mxu0 %v53
    %273 = vmatpush1.msra.mxu0 %v52
    %274 = vmatprep.subr.mxu0 0.0
    %275 = vmatpush1.msra.mxu0 0.0
    %276 = vmatprep.subr.mxu0 0.0
    %277 = vmatpush1.msra.mxu0 0.0
    %278 = vmatprep.subr.mxu0 0.0
    %279 = vmatpush1.msra.mxu0 0.0
    %280 = vmatprep.subr.mxu0 0.0
    %281 = vmatpush1.msra.mxu0 0.0
    %282 = vmatprep.subr.mxu0 0.0
    %283 = vmatpush1.msra.mxu0 0.0
    %284 = vmatprep.subr.mxu0 0.0
    %285 = vmatpush1.msra.mxu0 0.0
    %286 = vmatprep.subr.mxu0 0.0
    %287 = vmatpush1.msra.mxu0 0.0
    %288 = vmatprep.subr.mxu0 0.0
    %289 = vmatpush1.msra.mxu0 0.0
    %290 = vmatprep.subr.mxu0 0.0
    %291 = vmatpush1.msra.mxu0 0.0
    %292 = vmatprep.subr.mxu0 0.0
    %293 = vmatpush1.msra.mxu0 0.0
    %294 = vmatprep.subr.mxu0 0.0
    %295 = vmatpush1.msra.mxu0 0.0
    %296 = vmatprep.subr.mxu0 0.0
    %297 = vmatpush1.msra.mxu0 0.0
    %298 = vmatprep.subr.mxu0 0.0
    %299 = vmatpush1.msra.mxu0 0.0
    %300 = vmatprep.subr.mxu0 0.0
    %301 = vmatpush1.msra.mxu0 0.0
    %302 = vmatprep.subr.mxu0 0.0
    %303 = vmatpush1.msra.mxu0 0.0
    %304 = vmatprep.subr.mxu0 0.0
    %305 = vmatpush1.msra.mxu0 0.0
    %306 = vmatprep.subr.mxu0 0.0
    %307 = vmatpush1.msra.mxu0 0.0
    %308 = vmatprep.subr.mxu0 0.0
    %309 = vmatpush1.msra.mxu0 0.0
    %310 = vmatprep.subr.mxu0 0.0
    %311 = vmatpush1.msra.mxu0 0.0
    %312 = vmatprep.subr.mxu0 0.0
    %313 = vmatpush1.msra.mxu0 0.0
    %314 = vmatprep.subr.mxu0 0.0
    %315 = vmatpush1.msra.mxu0 0.0
    %316 = vmatprep.subr.mxu0 0.0
    %317 = vmatpush1.msra.mxu0 0.0
    %318 = vmatprep.subr.mxu0 0.0
    %319 = vmatpush1.msra.mxu0 0.0
    %320 = vmatprep.subr.mxu0 0.0
    %321 = vmatpush1.msra.mxu0 0.0
    %322 = vmatprep.subr.mxu0 0.0
    %323 = vmatpush1.msra.mxu0 0.0
    %324 = vmatprep.subr.mxu0 0.0
    %325 = vmatpush1.msra.mxu0 0.0
    %326 = vmatprep.subr.mxu0 0.0
    %327 = vmatpush1.msra.mxu0 0.0
    %328 = vmatprep.subr.mxu0 0.0
    %329 = vmatpush1.msra.mxu0 0.0
    %330 = vmatprep.subr.mxu0 0.0
    %331 = vmatpush1.msra.mxu0 0.0
    %332 = vmatprep.subr.mxu0 0.0
    %333 = vmatpush1.msra.mxu0 0.0
    %334 = vmatprep.subr.mxu0 0.0
    %335 = vmatpush1.msra.mxu0 0.0
    %336 = vmatprep.mubr.f32.mxu0 0.0
    %337 = vmatmul.mubr.f32.gmra.mrb[0].mxu0 %v57
    %v338 = vpop.f32.mrb[0].mxu0
    %v339 = vadd.f32 0.0, %v338
    %v340 = vpop.f32.mrb[0].mxu0
    %v341 = vadd.f32 0.0, %v340
    %342 = vdwg.mxu0
    %343 = vmatprep.subr.mxu0 0.0
    %344 = vmatpush1.msra.mxu0 %v54
    %345 = vmatprep.subr.mxu0 0.0
    %346 = vmatpush1.msra.mxu0 0.0
    %347 = vmatprep.subr.mxu0 0.0
    %348 = vmatpush1.msra.mxu0 0.0
    %349 = vmatprep.subr.mxu0 0.0
    %350 = vmatpush1.msra.mxu0 0.0
    %351 = vmatprep.subr.mxu0 0.0
    %352 = vmatpush1.msra.mxu0 0.0
    %353 = vmatprep.subr.mxu0 0.0
    %354 = vmatpush1.msra.mxu0 0.0
    %355 = vmatprep.subr.mxu0 0.0
    %356 = vmatpush1.msra.mxu0 0.0
    %357 = vmatprep.subr.mxu0 0.0
    %358 = vmatpush1.msra.mxu0 0.0
    %359 = vmatprep.subr.mxu0 0.0
    %360 = vmatpush1.msra.mxu0 0.0
    %361 = vmatprep.subr.mxu0 0.0
    %362 = vmatpush1.msra.mxu0 0.0
    %363 = vmatprep.subr.mxu0 0.0
    %364 = vmatpush1.msra.mxu0 0.0
    %365 = vmatprep.subr.mxu0 0.0
    %366 = vmatpush1.msra.mxu0 0.0
    %367 = vmatprep.subr.mxu0 0.0
    %368 = vmatpush1.msra.mxu0 0.0
    %369 = vmatprep.subr.mxu0 0.0
    %370 = vmatpush1.msra.mxu0 0.0
    %371 = vmatprep.subr.mxu0 0.0
    %372 = vmatpush1.msra.mxu0 0.0
    %373 = vmatprep.subr.mxu0 0.0
    %374 = vmatpush1.msra.mxu0 0.0
    %375 = vmatprep.subr.mxu0 0.0
    %376 = vmatpush1.msra.mxu0 0.0
    %377 = vmatprep.subr.mxu0 0.0
    %378 = vmatpush1.msra.mxu0 0.0
    %379 = vmatprep.subr.mxu0 0.0
    %380 = vmatpush1.msra.mxu0 0.0
    %381 = vmatprep.subr.mxu0 0.0
    %382 = vmatpush1.msra.mxu0 0.0
    %383 = vmatprep.subr.mxu0 0.0
    %384 = vmatpush1.msra.mxu0 0.0
    %385 = vmatprep.subr.mxu0 0.0
    %386 = vmatpush1.msra.mxu0 0.0
    %387 = vmatprep.subr.mxu0 0.0
    %388 = vmatpush1.msra.mxu0 0.0
    %389 = vmatprep.subr.mxu0 0.0
    %390 = vmatpush1.msra.mxu0 0.0
    %391 = vmatprep.subr.mxu0 0.0
    %392 = vmatpush1.msra.mxu0 0.0
    %393 = vmatprep.subr.mxu0 0.0
    %394 = vmatpush1.msra.mxu0 0.0
    %395 = vmatprep.subr.mxu0 0.0
    %396 = vmatpush1.msra.mxu0 0.0
    %397 = vmatprep.subr.mxu0 0.0
    %398 = vmatpush1.msra.mxu0 0.0
    %399 = vmatprep.subr.mxu0 0.0
    %400 = vmatpush1.msra.mxu0 0.0
    %401 = vmatprep.subr.mxu0 0.0
    %402 = vmatpush1.msra.mxu0 0.0
    %403 = vmatprep.subr.mxu0 0.0
    %404 = vmatpush1.msra.mxu0 0.0
    %405 = vmatprep.subr.mxu0 0.0
    %406 = vmatpush1.msra.mxu0 0.0
    %407 = vmatprep.mubr.f32.mxu0 0.0
    %408 = vmatmul.mubr.f32.gmra.mrb[0].mxu0 %v57
    %v409 = vpop.f32.mrb[0].mxu0
    %v410 = vadd.f32 0.0, %v409
    %v411 = vpop.f32.mrb[0].mxu0
    %412 = vdwg.mxu0
    %vm413 = vcmp.gt.f32.partialorder %v126, 0.0
    %v414 = vmul.f32 %v126, 0.01
    %v415 = vsel %vm413, %v126, %v414
    %v416 = vld [vmem:[#allocation2] sm:$0xff]
    %v417 = vld [vmem:[#allocation2 + $0x8] sm:$0xff]
    %v418 = vld [vmem:[#allocation2 + $0x10] sm:$0xff]
    %v419 = vld [vmem:[#allocation2 + $0x18] sm:$0xff]
    %v420 = vld [vmem:[#allocation2 + $0x20] sm:$0xff]
    %v421 = vld [vmem:[#allocation2 + $0x28] sm:$0xff]
    %v422 = vld [vmem:[#allocation2 + $0x30] sm:$0xff]
    %v423 = vld [vmem:[#allocation2 + $0x38] sm:$0xff]
    %v424 = vld [vmem:[#allocation2 + $0x40] sm:$0xff]
    %v425 = vld [vmem:[#allocation2 + $0x48] sm:$0xff]
    %v426 = vld [vmem:[#allocation2 + $0x50] sm:$0xff]
    %v427 = vld [vmem:[#allocation2 + $0x58] sm:$0xff]
    %v428 = vld [vmem:[#allocation2 + $0x60] sm:$0xff]
    %v429 = vld [vmem:[#allocation2 + $0x68] sm:$0xff]
    %v430 = vld [vmem:[#allocation2 + $0x70] sm:$0xff]
    %v431 = vld [vmem:[#allocation2 + $0x78] sm:$0xff]
    %432 = vmatprep.subr.mxu0 0.0
    %433 = vmatpush1.msra.mxu0 %v416
    %434 = vmatprep.subr.mxu0 0.0
    %435 = vmatpush1.msra.mxu0 %v417
    %436 = vmatprep.subr.mxu0 0.0
    %437 = vmatpush1.msra.mxu0 %v418
    %438 = vmatprep.subr.mxu0 0.0
    %439 = vmatpush1.msra.mxu0 %v419
    %440 = vmatprep.subr.mxu0 0.0
    %441 = vmatpush1.msra.mxu0 %v420
    %442 = vmatprep.subr.mxu0 0.0
    %443 = vmatpush1.msra.mxu0 %v421
    %444 = vmatprep.subr.mxu0 0.0
    %445 = vmatpush1.msra.mxu0 %v422
    %446 = vmatprep.subr.mxu0 0.0
    %447 = vmatpush1.msra.mxu0 %v423
    %448 = vmatprep.subr.mxu0 0.0
    %449 = vmatpush1.msra.mxu0 %v424
    %450 = vmatprep.subr.mxu0 0.0
    %451 = vmatpush1.msra.mxu0 %v425
    %452 = vmatprep.subr.mxu0 0.0
    %453 = vmatpush1.msra.mxu0 %v426
    %454 = vmatprep.subr.mxu0 0.0
    %455 = vmatpush1.msra.mxu0 %v427
    %456 = vmatprep.subr.mxu0 0.0
    %457 = vmatpush1.msra.mxu0 %v428
    %458 = vmatprep.subr.mxu0 0.0
    %459 = vmatpush1.msra.mxu0 %v429
    %460 = vmatprep.subr.mxu0 0.0
    %461 = vmatpush1.msra.mxu0 %v430
    %462 = vmatprep.subr.mxu0 0.0
    %463 = vmatpush1.msra.mxu0 %v431
    %464 = vmatprep.subr.mxu0 0.0
    %465 = vmatpush1.msra.mxu0 0.0
    %466 = vmatprep.subr.mxu0 0.0
    %467 = vmatpush1.msra.mxu0 0.0
    %468 = vmatprep.subr.mxu0 0.0
    %469 = vmatpush1.msra.mxu0 0.0
    %470 = vmatprep.subr.mxu0 0.0
    %471 = vmatpush1.msra.mxu0 0.0
    %472 = vmatprep.subr.mxu0 0.0
    %473 = vmatpush1.msra.mxu0 0.0
    %474 = vmatprep.subr.mxu0 0.0
    %475 = vmatpush1.msra.mxu0 0.0
    %476 = vmatprep.subr.mxu0 0.0
    %477 = vmatpush1.msra.mxu0 0.0
    %478 = vmatprep.subr.mxu0 0.0
    %479 = vmatpush1.msra.mxu0 0.0
    %480 = vmatprep.subr.mxu0 0.0
    %481 = vmatpush1.msra.mxu0 0.0
    %482 = vmatprep.subr.mxu0 0.0
    %483 = vmatpush1.msra.mxu0 0.0
    %484 = vmatprep.subr.mxu0 0.0
    %485 = vmatpush1.msra.mxu0 0.0
    %486 = vmatprep.subr.mxu0 0.0
    %487 = vmatpush1.msra.mxu0 0.0
    %488 = vmatprep.subr.mxu0 0.0
    %489 = vmatpush1.msra.mxu0 0.0
    %490 = vmatprep.subr.mxu0 0.0
    %491 = vmatpush1.msra.mxu0 0.0
    %492 = vmatprep.subr.mxu0 0.0
    %493 = vmatpush1.msra.mxu0 0.0
    %494 = vmatprep.subr.mxu0 0.0
    %495 = vmatpush1.msra.mxu0 0.0
    %496 = vmatprep.mubr.f32.mxu0 0.0
    %497 = vmatmul.mubr.f32.gmra.mrb[0].mxu0 %v415
    %v498 = vpop.f32.mrb[0].mxu0
    %v499 = vadd.f32 %v128, %v498
    %v500 = vpop.f32.mrb[0].mxu0
    %501 = vdwg.mxu0
    %vm502 = vcmp.gt.f32.partialorder %v499, 0.0
    %v503 = vmul.f32 %v499, 0.01
    %v504 = vsel %vm502, %v499, %v503
    %s505 = scalar_lea.vmem [#allocation2], 128
    %v506 = vld [vmem:[%s505] sm:$0xff]
    %v507 = vld [vmem:[%s505 + $0x8] sm:$0xff]
    %v508 = vld [vmem:[%s505 + $0x10] sm:$0xff]
    %v509 = vld [vmem:[%s505 + $0x18] sm:$0xff]
    %v510 = vld [vmem:[%s505 + $0x20] sm:$0xff]
    %v511 = vld [vmem:[%s505 + $0x28] sm:$0xff]
    %v512 = vld [vmem:[%s505 + $0x30] sm:$0xff]
    %v513 = vld [vmem:[%s505 + $0x38] sm:$0xff]
    %v514 = vld [vmem:[%s505 + $0x40] sm:$0xff]
    %v515 = vld [vmem:[%s505 + $0x48] sm:$0xff]
    %v516 = vld [vmem:[%s505 + $0x50] sm:$0xff]
    %v517 = vld [vmem:[%s505 + $0x58] sm:$0xff]
    %v518 = vld [vmem:[%s505 + $0x60] sm:$0xff]
    %v519 = vld [vmem:[%s505 + $0x68] sm:$0xff]
    %v520 = vld [vmem:[%s505 + $0x70] sm:$0xff]
    %v521 = vld [vmem:[%s505 + $0x78] sm:$0xff]
    %522 = vmatprep.subr.mxu0 0.0
    %523 = vmatpush1.msra.mxu0 %v506
    %524 = vmatprep.subr.mxu0 0.0
    %525 = vmatpush1.msra.mxu0 %v507
    %526 = vmatprep.subr.mxu0 0.0
    %527 = vmatpush1.msra.mxu0 %v508
    %528 = vmatprep.subr.mxu0 0.0
    %529 = vmatpush1.msra.mxu0 %v509
    %530 = vmatprep.subr.mxu0 0.0
    %531 = vmatpush1.msra.mxu0 %v510
    %532 = vmatprep.subr.mxu0 0.0
    %533 = vmatpush1.msra.mxu0 %v511
    %534 = vmatprep.subr.mxu0 0.0
    %535 = vmatpush1.msra.mxu0 %v512
    %536 = vmatprep.subr.mxu0 0.0
    %537 = vmatpush1.msra.mxu0 %v513
    %538 = vmatprep.subr.mxu0 0.0
    %539 = vmatpush1.msra.mxu0 %v514
    %540 = vmatprep.subr.mxu0 0.0
    %541 = vmatpush1.msra.mxu0 %v515
    %542 = vmatprep.subr.mxu0 0.0
    %543 = vmatpush1.msra.mxu0 %v516
    %544 = vmatprep.subr.mxu0 0.0
    %545 = vmatpush1.msra.mxu0 %v517
    %546 = vmatprep.subr.mxu0 0.0
    %547 = vmatpush1.msra.mxu0 %v518
    %548 = vmatprep.subr.mxu0 0.0
    %549 = vmatpush1.msra.mxu0 %v519
    %550 = vmatprep.subr.mxu0 0.0
    %551 = vmatpush1.msra.mxu0 %v520
    %552 = vmatprep.subr.mxu0 0.0
    %553 = vmatpush1.msra.mxu0 %v521
    %554 = vmatprep.subr.mxu0 0.0
    %555 = vmatpush1.msra.mxu0 0.0
    %556 = vmatprep.subr.mxu0 0.0
    %557 = vmatpush1.msra.mxu0 0.0
    %558 = vmatprep.subr.mxu0 0.0
    %559 = vmatpush1.msra.mxu0 0.0
    %560 = vmatprep.subr.mxu0 0.0
    %561 = vmatpush1.msra.mxu0 0.0
    %562 = vmatprep.subr.mxu0 0.0
    %563 = vmatpush1.msra.mxu0 0.0
    %564 = vmatprep.subr.mxu0 0.0
    %565 = vmatpush1.msra.mxu0 0.0
    %566 = vmatprep.subr.mxu0 0.0
    %567 = vmatpush1.msra.mxu0 0.0
    %568 = vmatprep.subr.mxu0 0.0
    %569 = vmatpush1.msra.mxu0 0.0
    %570 = vmatprep.subr.mxu0 0.0
    %571 = vmatpush1.msra.mxu0 0.0
    %572 = vmatprep.subr.mxu0 0.0
    %573 = vmatpush1.msra.mxu0 0.0
    %574 = vmatprep.subr.mxu0 0.0
    %575 = vmatpush1.msra.mxu0 0.0
    %576 = vmatprep.subr.mxu0 0.0
    %577 = vmatpush1.msra.mxu0 0.0
    %578 = vmatprep.subr.mxu0 0.0
    %579 = vmatpush1.msra.mxu0 0.0
    %580 = vmatprep.subr.mxu0 0.0
    %581 = vmatpush1.msra.mxu0 0.0
    %582 = vmatprep.subr.mxu0 0.0
    %583 = vmatpush1.msra.mxu0 0.0
    %584 = vmatprep.subr.mxu0 0.0
    %585 = vmatpush1.msra.mxu0 0.0
    %586 = vmatprep.mubr.f32.mxu0 0.0
    %587 = vmatmul.mubr.f32.gmra.mrb[0].mxu0 %v504
    %v588 = vpop.f32.mrb[0].mxu0
    %v589 = vadd.f32 %v197, %v588
    %v590 = vpop.f32.mrb[0].mxu0
    %591 = vdwg.mxu0
    %s592 = scalar_lea.vmem [#allocation4], 128
    %v593 = vld [vmem:[%s592] sm:$0xff]
    %v594 = vld [vmem:[%s592 + $0x8] sm:$0xff]
    %v595 = vld [vmem:[%s592 + $0x10] sm:$0xff]
    %v596 = vld [vmem:[%s592 + $0x18] sm:$0xff]
    %v597 = vld [vmem:[%s592 + $0x20] sm:$0xff]
    %v598 = vld [vmem:[%s592 + $0x28] sm:$0xff]
    %v599 = vld [vmem:[%s592 + $0x30] sm:$0xff]
    %v600 = vld [vmem:[%s592 + $0x38] sm:$0xff]
    %v601 = vld [vmem:[%s592 + $0x40] sm:$0xff]
    %v602 = vld [vmem:[%s592 + $0x48] sm:$0xff]
    %v603 = vld [vmem:[%s592 + $0x50] sm:$0xff]
    %v604 = vld [vmem:[%s592 + $0x58] sm:$0xff]
    %v605 = vld [vmem:[%s592 + $0x60] sm:$0xff]
    %v606 = vld [vmem:[%s592 + $0x68] sm:$0xff]
    %v607 = vld [vmem:[%s592 + $0x70] sm:$0xff]
    %v608 = vld [vmem:[%s592 + $0x78] sm:$0xff]
    %609 = vmatprep.subr.mxu0 0.0
    %610 = vmatpush1.msra.mxu0 %v593
    %611 = vmatprep.subr.mxu0 0.0
    %612 = vmatpush1.msra.mxu0 %v594
    %613 = vmatprep.subr.mxu0 0.0
    %614 = vmatpush1.msra.mxu0 %v595
    %615 = vmatprep.subr.mxu0 0.0
    %616 = vmatpush1.msra.mxu0 %v596
    %617 = vmatprep.subr.mxu0 0.0
    %618 = vmatpush1.msra.mxu0 %v597
    %619 = vmatprep.subr.mxu0 0.0
    %620 = vmatpush1.msra.mxu0 %v598
    %621 = vmatprep.subr.mxu0 0.0
    %622 = vmatpush1.msra.mxu0 %v599
    %623 = vmatprep.subr.mxu0 0.0
    %624 = vmatpush1.msra.mxu0 %v600
    %625 = vmatprep.subr.mxu0 0.0
    %626 = vmatpush1.msra.mxu0 %v601
    %627 = vmatprep.subr.mxu0 0.0
    %628 = vmatpush1.msra.mxu0 %v602
    %629 = vmatprep.subr.mxu0 0.0
    %630 = vmatpush1.msra.mxu0 %v603
    %631 = vmatprep.subr.mxu0 0.0
    %632 = vmatpush1.msra.mxu0 %v604
    %633 = vmatprep.subr.mxu0 0.0
    %634 = vmatpush1.msra.mxu0 %v605
    %635 = vmatprep.subr.mxu0 0.0
    %636 = vmatpush1.msra.mxu0 %v606
    %637 = vmatprep.subr.mxu0 0.0
    %638 = vmatpush1.msra.mxu0 %v607
    %639 = vmatprep.subr.mxu0 0.0
    %640 = vmatpush1.msra.mxu0 %v608
    %641 = vmatprep.subr.mxu0 0.0
    %642 = vmatpush1.msra.mxu0 0.0
    %643 = vmatprep.subr.mxu0 0.0
    %644 = vmatpush1.msra.mxu0 0.0
    %645 = vmatprep.subr.mxu0 0.0
    %646 = vmatpush1.msra.mxu0 0.0
    %647 = vmatprep.subr.mxu0 0.0
    %648 = vmatpush1.msra.mxu0 0.0
    %649 = vmatprep.subr.mxu0 0.0
    %650 = vmatpush1.msra.mxu0 0.0
    %651 = vmatprep.subr.mxu0 0.0
    %652 = vmatpush1.msra.mxu0 0.0
    %653 = vmatprep.subr.mxu0 0.0
    %654 = vmatpush1.msra.mxu0 0.0
    %655 = vmatprep.subr.mxu0 0.0
    %656 = vmatpush1.msra.mxu0 0.0
    %657 = vmatprep.subr.mxu0 0.0
    %658 = vmatpush1.msra.mxu0 0.0
    %659 = vmatprep.subr.mxu0 0.0
    %660 = vmatpush1.msra.mxu0 0.0
    %661 = vmatprep.subr.mxu0 0.0
    %662 = vmatpush1.msra.mxu0 0.0
    %663 = vmatprep.subr.mxu0 0.0
    %664 = vmatpush1.msra.mxu0 0.0
    %665 = vmatprep.subr.mxu0 0.0
    %666 = vmatpush1.msra.mxu0 0.0
    %667 = vmatprep.subr.mxu0 0.0
    %668 = vmatpush1.msra.mxu0 0.0
    %669 = vmatprep.subr.mxu0 0.0
    %670 = vmatpush1.msra.mxu0 0.0
    %671 = vmatprep.subr.mxu0 0.0
    %672 = vmatpush1.msra.mxu0 0.0
    %673 = vmatprep.mubr.f32.mxu0 0.0
    %674 = vmatmul.mubr.f32.gmra.mrb[0].mxu0 %v415
    %v675 = vpop.f32.mrb[0].mxu0
    %v676 = vadd.f32 0.0, %v675
    %v677 = vpop.f32.mrb[0].mxu0
    %678 = vdwg.mxu0
    %v679 = vadd.f32 %v589, %v676
    %vm680 = vcmp.gt.f32.partialorder %v679, 0.0
    %v681 = vmul.f32 %v679, 0.01
    %v682 = vsel %vm680, %v679, %v681
    %s683 = scalar_lea.vmem [#allocation2], 256
    %v684 = vld [vmem:[%s683] sm:$0xff]
    %v685 = vld [vmem:[%s683 + $0x8] sm:$0xff]
    %v686 = vld [vmem:[%s683 + $0x10] sm:$0xff]
    %v687 = vld [vmem:[%s683 + $0x18] sm:$0xff]
    %v688 = vld [vmem:[%s683 + $0x20] sm:$0xff]
    %v689 = vld [vmem:[%s683 + $0x28] sm:$0xff]
    %v690 = vld [vmem:[%s683 + $0x30] sm:$0xff]
    %v691 = vld [vmem:[%s683 + $0x38] sm:$0xff]
    %v692 = vld [vmem:[%s683 + $0x40] sm:$0xff]
    %v693 = vld [vmem:[%s683 + $0x48] sm:$0xff]
    %v694 = vld [vmem:[%s683 + $0x50] sm:$0xff]
    %v695 = vld [vmem:[%s683 + $0x58] sm:$0xff]
    %v696 = vld [vmem:[%s683 + $0x60] sm:$0xff]
    %v697 = vld [vmem:[%s683 + $0x68] sm:$0xff]
    %v698 = vld [vmem:[%s683 + $0x70] sm:$0xff]
    %v699 = vld [vmem:[%s683 + $0x78] sm:$0xff]
    %700 = vmatprep.subr.mxu0 0.0
    %701 = vmatpush1.msra.mxu0 %v684
    %702 = vmatprep.subr.mxu0 0.0
    %703 = vmatpush1.msra.mxu0 %v685
    %704 = vmatprep.subr.mxu0 0.0
    %705 = vmatpush1.msra.mxu0 %v686
    %706 = vmatprep.subr.mxu0 0.0
    %707 = vmatpush1.msra.mxu0 %v687
    %708 = vmatprep.subr.mxu0 0.0
    %709 = vmatpush1.msra.mxu0 %v688
    %710 = vmatprep.subr.mxu0 0.0
    %711 = vmatpush1.msra.mxu0 %v689
    %712 = vmatprep.subr.mxu0 0.0
    %713 = vmatpush1.msra.mxu0 %v690
    %714 = vmatprep.subr.mxu0 0.0
    %715 = vmatpush1.msra.mxu0 %v691
    %716 = vmatprep.subr.mxu0 0.0
    %717 = vmatpush1.msra.mxu0 %v692
    %718 = vmatprep.subr.mxu0 0.0
    %719 = vmatpush1.msra.mxu0 %v693
    %720 = vmatprep.subr.mxu0 0.0
    %721 = vmatpush1.msra.mxu0 %v694
    %722 = vmatprep.subr.mxu0 0.0
    %723 = vmatpush1.msra.mxu0 %v695
    %724 = vmatprep.subr.mxu0 0.0
    %725 = vmatpush1.msra.mxu0 %v696
    %726 = vmatprep.subr.mxu0 0.0
    %727 = vmatpush1.msra.mxu0 %v697
    %728 = vmatprep.subr.mxu0 0.0
    %729 = vmatpush1.msra.mxu0 %v698
    %730 = vmatprep.subr.mxu0 0.0
    %731 = vmatpush1.msra.mxu0 %v699
    %732 = vmatprep.subr.mxu0 0.0
    %733 = vmatpush1.msra.mxu0 0.0
    %734 = vmatprep.subr.mxu0 0.0
    %735 = vmatpush1.msra.mxu0 0.0
    %736 = vmatprep.subr.mxu0 0.0
    %737 = vmatpush1.msra.mxu0 0.0
    %738 = vmatprep.subr.mxu0 0.0
    %739 = vmatpush1.msra.mxu0 0.0
    %740 = vmatprep.subr.mxu0 0.0
    %741 = vmatpush1.msra.mxu0 0.0
    %742 = vmatprep.subr.mxu0 0.0
    %743 = vmatpush1.msra.mxu0 0.0
    %744 = vmatprep.subr.mxu0 0.0
    %745 = vmatpush1.msra.mxu0 0.0
    %746 = vmatprep.subr.mxu0 0.0
    %747 = vmatpush1.msra.mxu0 0.0
    %748 = vmatprep.subr.mxu0 0.0
    %749 = vmatpush1.msra.mxu0 0.0
    %750 = vmatprep.subr.mxu0 0.0
    %751 = vmatpush1.msra.mxu0 0.0
    %752 = vmatprep.subr.mxu0 0.0
    %753 = vmatpush1.msra.mxu0 0.0
    %754 = vmatprep.subr.mxu0 0.0
    %755 = vmatpush1.msra.mxu0 0.0
    %756 = vmatprep.subr.mxu0 0.0
    %757 = vmatpush1.msra.mxu0 0.0
    %758 = vmatprep.subr.mxu0 0.0
    %759 = vmatpush1.msra.mxu0 0.0
    %760 = vmatprep.subr.mxu0 0.0
    %761 = vmatpush1.msra.mxu0 0.0
    %762 = vmatprep.subr.mxu0 0.0
    %763 = vmatpush1.msra.mxu0 0.0
    %764 = vmatprep.mubr.f32.mxu0 0.0
    %765 = vmatmul.mubr.f32.gmra.mrb[0].mxu0 %v682
    %v766 = vpop.f32.mrb[0].mxu0
    %v767 = vadd.f32 %v199, %v766
    %v768 = vpop.f32.mrb[0].mxu0
    %769 = vdwg.mxu0
    %s770 = scalar_lea.vmem [#allocation4], 256
    %v771 = vld [vmem:[%s770] sm:$0xff]
    %v772 = vld [vmem:[%s770 + $0x8] sm:$0xff]
    %v773 = vld [vmem:[%s770 + $0x10] sm:$0xff]
    %v774 = vld [vmem:[%s770 + $0x18] sm:$0xff]
    %v775 = vld [vmem:[%s770 + $0x20] sm:$0xff]
    %v776 = vld [vmem:[%s770 + $0x28] sm:$0xff]
    %v777 = vld [vmem:[%s770 + $0x30] sm:$0xff]
    %v778 = vld [vmem:[%s770 + $0x38] sm:$0xff]
    %v779 = vld [vmem:[%s770 + $0x40] sm:$0xff]
    %v780 = vld [vmem:[%s770 + $0x48] sm:$0xff]
    %v781 = vld [vmem:[%s770 + $0x50] sm:$0xff]
    %v782 = vld [vmem:[%s770 + $0x58] sm:$0xff]
    %v783 = vld [vmem:[%s770 + $0x60] sm:$0xff]
    %v784 = vld [vmem:[%s770 + $0x68] sm:$0xff]
    %v785 = vld [vmem:[%s770 + $0x70] sm:$0xff]
    %v786 = vld [vmem:[%s770 + $0x78] sm:$0xff]
    %787 = vmatprep.subr.mxu0 0.0
    %788 = vmatpush1.msra.mxu0 %v771
    %789 = vmatprep.subr.mxu0 0.0
    %790 = vmatpush1.msra.mxu0 %v772
    %791 = vmatprep.subr.mxu0 0.0
    %792 = vmatpush1.msra.mxu0 %v773
    %793 = vmatprep.subr.mxu0 0.0
    %794 = vmatpush1.msra.mxu0 %v774
    %795 = vmatprep.subr.mxu0 0.0
    %796 = vmatpush1.msra.mxu0 %v775
    %797 = vmatprep.subr.mxu0 0.0
    %798 = vmatpush1.msra.mxu0 %v776
    %799 = vmatprep.subr.mxu0 0.0
    %800 = vmatpush1.msra.mxu0 %v777
    %801 = vmatprep.subr.mxu0 0.0
    %802 = vmatpush1.msra.mxu0 %v778
    %803 = vmatprep.subr.mxu0 0.0
    %804 = vmatpush1.msra.mxu0 %v779
    %805 = vmatprep.subr.mxu0 0.0
    %806 = vmatpush1.msra.mxu0 %v780
    %807 = vmatprep.subr.mxu0 0.0
    %808 = vmatpush1.msra.mxu0 %v781
    %809 = vmatprep.subr.mxu0 0.0
    %810 = vmatpush1.msra.mxu0 %v782
    %811 = vmatprep.subr.mxu0 0.0
    %812 = vmatpush1.msra.mxu0 %v783
    %813 = vmatprep.subr.mxu0 0.0
    %814 = vmatpush1.msra.mxu0 %v784
    %815 = vmatprep.subr.mxu0 0.0
    %816 = vmatpush1.msra.mxu0 %v785
    %817 = vmatprep.subr.mxu0 0.0
    %818 = vmatpush1.msra.mxu0 %v786
    %819 = vmatprep.subr.mxu0 0.0
    %820 = vmatpush1.msra.mxu0 0.0
    %821 = vmatprep.subr.mxu0 0.0
    %822 = vmatpush1.msra.mxu0 0.0
    %823 = vmatprep.subr.mxu0 0.0
    %824 = vmatpush1.msra.mxu0 0.0
    %825 = vmatprep.subr.mxu0 0.0
    %826 = vmatpush1.msra.mxu0 0.0
    %827 = vmatprep.subr.mxu0 0.0
    %828 = vmatpush1.msra.mxu0 0.0
    %829 = vmatprep.subr.mxu0 0.0
    %830 = vmatpush1.msra.mxu0 0.0
    %831 = vmatprep.subr.mxu0 0.0
    %832 = vmatpush1.msra.mxu0 0.0
    %833 = vmatprep.subr.mxu0 0.0
    %834 = vmatpush1.msra.mxu0 0.0
    %835 = vmatprep.subr.mxu0 0.0
    %836 = vmatpush1.msra.mxu0 0.0
    %837 = vmatprep.subr.mxu0 0.0
    %838 = vmatpush1.msra.mxu0 0.0
    %839 = vmatprep.subr.mxu0 0.0
    %840 = vmatpush1.msra.mxu0 0.0
    %841 = vmatprep.subr.mxu0 0.0
    %842 = vmatpush1.msra.mxu0 0.0
    %843 = vmatprep.subr.mxu0 0.0
    %844 = vmatpush1.msra.mxu0 0.0
    %845 = vmatprep.subr.mxu0 0.0
    %846 = vmatpush1.msra.mxu0 0.0
    %847 = vmatprep.subr.mxu0 0.0
    %848 = vmatpush1.msra.mxu0 0.0
    %849 = vmatprep.subr.mxu0 0.0
    %850 = vmatpush1.msra.mxu0 0.0
    %851 = vmatprep.mubr.f32.mxu0 0.0
    %852 = vmatmul.mubr.f32.gmra.mrb[0].mxu0 %v504
    %v853 = vpop.f32.mrb[0].mxu0
    %v854 = vadd.f32 0.0, %v853
    %v855 = vpop.f32.mrb[0].mxu0
    %856 = vdwg.mxu0
    %v857 = vadd.f32 %v767, %v854
    %vm858 = vcmp.gt.f32.partialorder %v857, 0.0
    %v859 = vmul.f32 %v857, 0.01
    %v860 = vsel %vm858, %v857, %v859
    %s861 = scalar_lea.vmem [#allocation2], 384
    %v862 = vld [vmem:[%s861] sm:$0xff]
    %v863 = vld [vmem:[%s861 + $0x8] sm:$0xff]
    %v864 = vld [vmem:[%s861 + $0x10] sm:$0xff]
    %v865 = vld [vmem:[%s861 + $0x18] sm:$0xff]
    %v866 = vld [vmem:[%s861 + $0x20] sm:$0xff]
    %v867 = vld [vmem:[%s861 + $0x28] sm:$0xff]
    %v868 = vld [vmem:[%s861 + $0x30] sm:$0xff]
    %v869 = vld [vmem:[%s861 + $0x38] sm:$0xff]
    %v870 = vld [vmem:[%s861 + $0x40] sm:$0xff]
    %v871 = vld [vmem:[%s861 + $0x48] sm:$0xff]
    %v872 = vld [vmem:[%s861 + $0x50] sm:$0xff]
    %v873 = vld [vmem:[%s861 + $0x58] sm:$0xff]
    %v874 = vld [vmem:[%s861 + $0x60] sm:$0xff]
    %v875 = vld [vmem:[%s861 + $0x68] sm:$0xff]
    %v876 = vld [vmem:[%s861 + $0x70] sm:$0xff]
    %v877 = vld [vmem:[%s861 + $0x78] sm:$0xff]
    %878 = vmatprep.subr.mxu0 0.0
    %879 = vmatpush1.msra.mxu0 %v862
    %880 = vmatprep.subr.mxu0 0.0
    %881 = vmatpush1.msra.mxu0 %v863
    %882 = vmatprep.subr.mxu0 0.0
    %883 = vmatpush1.msra.mxu0 %v864
    %884 = vmatprep.subr.mxu0 0.0
    %885 = vmatpush1.msra.mxu0 %v865
    %886 = vmatprep.subr.mxu0 0.0
    %887 = vmatpush1.msra.mxu0 %v866
    %888 = vmatprep.subr.mxu0 0.0
    %889 = vmatpush1.msra.mxu0 %v867
    %890 = vmatprep.subr.mxu0 0.0
    %891 = vmatpush1.msra.mxu0 %v868
    %892 = vmatprep.subr.mxu0 0.0
    %893 = vmatpush1.msra.mxu0 %v869
    %894 = vmatprep.subr.mxu0 0.0
    %895 = vmatpush1.msra.mxu0 %v870
    %896 = vmatprep.subr.mxu0 0.0
    %897 = vmatpush1.msra.mxu0 %v871
    %898 = vmatprep.subr.mxu0 0.0
    %899 = vmatpush1.msra.mxu0 %v872
    %900 = vmatprep.subr.mxu0 0.0
    %901 = vmatpush1.msra.mxu0 %v873
    %902 = vmatprep.subr.mxu0 0.0
    %903 = vmatpush1.msra.mxu0 %v874
    %904 = vmatprep.subr.mxu0 0.0
    %905 = vmatpush1.msra.mxu0 %v875
    %906 = vmatprep.subr.mxu0 0.0
    %907 = vmatpush1.msra.mxu0 %v876
    %908 = vmatprep.subr.mxu0 0.0
    %909 = vmatpush1.msra.mxu0 %v877
    %910 = vmatprep.subr.mxu0 0.0
    %911 = vmatpush1.msra.mxu0 0.0
    %912 = vmatprep.subr.mxu0 0.0
    %913 = vmatpush1.msra.mxu0 0.0
    %914 = vmatprep.subr.mxu0 0.0
    %915 = vmatpush1.msra.mxu0 0.0
    %916 = vmatprep.subr.mxu0 0.0
    %917 = vmatpush1.msra.mxu0 0.0
    %918 = vmatprep.subr.mxu0 0.0
    %919 = vmatpush1.msra.mxu0 0.0
    %920 = vmatprep.subr.mxu0 0.0
    %921 = vmatpush1.msra.mxu0 0.0
    %922 = vmatprep.subr.mxu0 0.0
    %923 = vmatpush1.msra.mxu0 0.0
    %924 = vmatprep.subr.mxu0 0.0
    %925 = vmatpush1.msra.mxu0 0.0
    %926 = vmatprep.subr.mxu0 0.0
    %927 = vmatpush1.msra.mxu0 0.0
    %928 = vmatprep.subr.mxu0 0.0
    %929 = vmatpush1.msra.mxu0 0.0
    %930 = vmatprep.subr.mxu0 0.0
    %931 = vmatpush1.msra.mxu0 0.0
    %932 = vmatprep.subr.mxu0 0.0
    %933 = vmatpush1.msra.mxu0 0.0
    %934 = vmatprep.subr.mxu0 0.0
    %935 = vmatpush1.msra.mxu0 0.0
    %936 = vmatprep.subr.mxu0 0.0
    %937 = vmatpush1.msra.mxu0 0.0
    %938 = vmatprep.subr.mxu0 0.0
    %939 = vmatpush1.msra.mxu0 0.0
    %940 = vmatprep.subr.mxu0 0.0
    %941 = vmatpush1.msra.mxu0 0.0
    %942 = vmatprep.mubr.f32.mxu0 0.0
    %943 = vmatmul.mubr.f32.gmra.mrb[0].mxu0 %v860
    %v944 = vpop.f32.mrb[0].mxu0
    %v945 = vadd.f32 %v268, %v944
    %v946 = vpop.f32.mrb[0].mxu0
    %947 = vdwg.mxu0
    %s948 = scalar_lea.vmem [#allocation4], 384
    %v949 = vld [vmem:[%s948] sm:$0xff]
    %v950 = vld [vmem:[%s948 + $0x8] sm:$0xff]
    %v951 = vld [vmem:[%s948 + $0x10] sm:$0xff]
    %v952 = vld [vmem:[%s948 + $0x18] sm:$0xff]
    %v953 = vld [vmem:[%s948 + $0x20] sm:$0xff]
    %v954 = vld [vmem:[%s948 + $0x28] sm:$0xff]
    %v955 = vld [vmem:[%s948 + $0x30] sm:$0xff]
    %v956 = vld [vmem:[%s948 + $0x38] sm:$0xff]
    %v957 = vld [vmem:[%s948 + $0x40] sm:$0xff]
    %v958 = vld [vmem:[%s948 + $0x48] sm:$0xff]
    %v959 = vld [vmem:[%s948 + $0x50] sm:$0xff]
    %v960 = vld [vmem:[%s948 + $0x58] sm:$0xff]
    %v961 = vld [vmem:[%s948 + $0x60] sm:$0xff]
    %v962 = vld [vmem:[%s948 + $0x68] sm:$0xff]
    %v963 = vld [vmem:[%s948 + $0x70] sm:$0xff]
    %v964 = vld [vmem:[%s948 + $0x78] sm:$0xff]
    %965 = vmatprep.subr.mxu0 0.0
    %966 = vmatpush1.msra.mxu0 %v949
    %967 = vmatprep.subr.mxu0 0.0
    %968 = vmatpush1.msra.mxu0 %v950
    %969 = vmatprep.subr.mxu0 0.0
    %970 = vmatpush1.msra.mxu0 %v951
    %971 = vmatprep.subr.mxu0 0.0
    %972 = vmatpush1.msra.mxu0 %v952
    %973 = vmatprep.subr.mxu0 0.0
    %974 = vmatpush1.msra.mxu0 %v953
    %975 = vmatprep.subr.mxu0 0.0
    %976 = vmatpush1.msra.mxu0 %v954
    %977 = vmatprep.subr.mxu0 0.0
    %978 = vmatpush1.msra.mxu0 %v955
    %979 = vmatprep.subr.mxu0 0.0
    %980 = vmatpush1.msra.mxu0 %v956
    %981 = vmatprep.subr.mxu0 0.0
    %982 = vmatpush1.msra.mxu0 %v957
    %983 = vmatprep.subr.mxu0 0.0
    %984 = vmatpush1.msra.mxu0 %v958
    %985 = vmatprep.subr.mxu0 0.0
    %986 = vmatpush1.msra.mxu0 %v959
    %987 = vmatprep.subr.mxu0 0.0
    %988 = vmatpush1.msra.mxu0 %v960
    %989 = vmatprep.subr.mxu0 0.0
    %990 = vmatpush1.msra.mxu0 %v961
    %991 = vmatprep.subr.mxu0 0.0
    %992 = vmatpush1.msra.mxu0 %v962
    %993 = vmatprep.subr.mxu0 0.0
    %994 = vmatpush1.msra.mxu0 %v963
    %995 = vmatprep.subr.mxu0 0.0
    %996 = vmatpush1.msra.mxu0 %v964
    %997 = vmatprep.subr.mxu0 0.0
    %998 = vmatpush1.msra.mxu0 0.0
    %999 = vmatprep.subr.mxu0 0.0
    %1000 = vmatpush1.msra.mxu0 0.0
    %1001 = vmatprep.subr.mxu0 0.0
    %1002 = vmatpush1.msra.mxu0 0.0
    %1003 = vmatprep.subr.mxu0 0.0
    %1004 = vmatpush1.msra.mxu0 0.0
    %1005 = vmatprep.subr.mxu0 0.0
    %1006 = vmatpush1.msra.mxu0 0.0
    %1007 = vmatprep.subr.mxu0 0.0
    %1008 = vmatpush1.msra.mxu0 0.0
    %1009 = vmatprep.subr.mxu0 0.0
    %1010 = vmatpush1.msra.mxu0 0.0
    %1011 = vmatprep.subr.mxu0 0.0
    %1012 = vmatpush1.msra.mxu0 0.0
    %1013 = vmatprep.subr.mxu0 0.0
    %1014 = vmatpush1.msra.mxu0 0.0
    %1015 = vmatprep.subr.mxu0 0.0
    %1016 = vmatpush1.msra.mxu0 0.0
    %1017 = vmatprep.subr.mxu0 0.0
    %1018 = vmatpush1.msra.mxu0 0.0
    %1019 = vmatprep.subr.mxu0 0.0
    %1020 = vmatpush1.msra.mxu0 0.0
    %1021 = vmatprep.subr.mxu0 0.0
    %1022 = vmatpush1.msra.mxu0 0.0
    %1023 = vmatprep.subr.mxu0 0.0
    %1024 = vmatpush1.msra.mxu0 0.0
    %1025 = vmatprep.subr.mxu0 0.0
    %1026 = vmatpush1.msra.mxu0 0.0
    %1027 = vmatprep.subr.mxu0 0.0
    %1028 = vmatpush1.msra.mxu0 0.0
    %1029 = vmatprep.mubr.f32.mxu0 0.0
    %1030 = vmatmul.mubr.f32.gmra.mrb[0].mxu0 %v682
    %v1031 = vpop.f32.mrb[0].mxu0
    %v1032 = vadd.f32 0.0, %v1031
    %v1033 = vpop.f32.mrb[0].mxu0
    %1034 = vdwg.mxu0
    %v1035 = vadd.f32 %v945, %v1032
    %vm1036 = vcmp.gt.f32.partialorder %v1035, 0.0
    %v1037 = vmul.f32 %v1035, 0.01
    %v1038 = vsel %vm1036, %v1035, %v1037
    %s1039 = scalar_lea.vmem [#allocation2], 512
    %v1040 = vld [vmem:[%s1039] sm:$0xff]
    %v1041 = vld [vmem:[%s1039 + $0x8] sm:$0xff]
    %v1042 = vld [vmem:[%s1039 + $0x10] sm:$0xff]
    %v1043 = vld [vmem:[%s1039 + $0x18] sm:$0xff]
    %v1044 = vld [vmem:[%s1039 + $0x20] sm:$0xff]
    %v1045 = vld [vmem:[%s1039 + $0x28] sm:$0xff]
    %v1046 = vld [vmem:[%s1039 + $0x30] sm:$0xff]
    %v1047 = vld [vmem:[%s1039 + $0x38] sm:$0xff]
    %v1048 = vld [vmem:[%s1039 + $0x40] sm:$0xff]
    %v1049 = vld [vmem:[%s1039 + $0x48] sm:$0xff]
    %v1050 = vld [vmem:[%s1039 + $0x50] sm:$0xff]
    %v1051 = vld [vmem:[%s1039 + $0x58] sm:$0xff]
    %v1052 = vld [vmem:[%s1039 + $0x60] sm:$0xff]
    %v1053 = vld [vmem:[%s1039 + $0x68] sm:$0xff]
    %v1054 = vld [vmem:[%s1039 + $0x70] sm:$0xff]
    %v1055 = vld [vmem:[%s1039 + $0x78] sm:$0xff]
    %1056 = vmatprep.subr.mxu0 0.0
    %1057 = vmatpush1.msra.mxu0 %v1040
    %1058 = vmatprep.subr.mxu0 0.0
    %1059 = vmatpush1.msra.mxu0 %v1041
    %1060 = vmatprep.subr.mxu0 0.0
    %1061 = vmatpush1.msra.mxu0 %v1042
    %1062 = vmatprep.subr.mxu0 0.0
    %1063 = vmatpush1.msra.mxu0 %v1043
    %1064 = vmatprep.subr.mxu0 0.0
    %1065 = vmatpush1.msra.mxu0 %v1044
    %1066 = vmatprep.subr.mxu0 0.0
    %1067 = vmatpush1.msra.mxu0 %v1045
    %1068 = vmatprep.subr.mxu0 0.0
    %1069 = vmatpush1.msra.mxu0 %v1046
    %1070 = vmatprep.subr.mxu0 0.0
    %1071 = vmatpush1.msra.mxu0 %v1047
    %1072 = vmatprep.subr.mxu0 0.0
    %1073 = vmatpush1.msra.mxu0 %v1048
    %1074 = vmatprep.subr.mxu0 0.0
    %1075 = vmatpush1.msra.mxu0 %v1049
    %1076 = vmatprep.subr.mxu0 0.0
    %1077 = vmatpush1.msra.mxu0 %v1050
    %1078 = vmatprep.subr.mxu0 0.0
    %1079 = vmatpush1.msra.mxu0 %v1051
    %1080 = vmatprep.subr.mxu0 0.0
    %1081 = vmatpush1.msra.mxu0 %v1052
    %1082 = vmatprep.subr.mxu0 0.0
    %1083 = vmatpush1.msra.mxu0 %v1053
    %1084 = vmatprep.subr.mxu0 0.0
    %1085 = vmatpush1.msra.mxu0 %v1054
    %1086 = vmatprep.subr.mxu0 0.0
    %1087 = vmatpush1.msra.mxu0 %v1055
    %1088 = vmatprep.subr.mxu0 0.0
    %1089 = vmatpush1.msra.mxu0 0.0
    %1090 = vmatprep.subr.mxu0 0.0
    %1091 = vmatpush1.msra.mxu0 0.0
    %1092 = vmatprep.subr.mxu0 0.0
    %1093 = vmatpush1.msra.mxu0 0.0
    %1094 = vmatprep.subr.mxu0 0.0
    %1095 = vmatpush1.msra.mxu0 0.0
    %1096 = vmatprep.subr.mxu0 0.0
    %1097 = vmatpush1.msra.mxu0 0.0
    %1098 = vmatprep.subr.mxu0 0.0
    %1099 = vmatpush1.msra.mxu0 0.0
    %1100 = vmatprep.subr.mxu0 0.0
    %1101 = vmatpush1.msra.mxu0 0.0
    %1102 = vmatprep.subr.mxu0 0.0
    %1103 = vmatpush1.msra.mxu0 0.0
    %1104 = vmatprep.subr.mxu0 0.0
    %1105 = vmatpush1.msra.mxu0 0.0
    %1106 = vmatprep.subr.mxu0 0.0
    %1107 = vmatpush1.msra.mxu0 0.0
    %1108 = vmatprep.subr.mxu0 0.0
    %1109 = vmatpush1.msra.mxu0 0.0
    %1110 = vmatprep.subr.mxu0 0.0
    %1111 = vmatpush1.msra.mxu0 0.0
    %1112 = vmatprep.subr.mxu0 0.0
    %1113 = vmatpush1.msra.mxu0 0.0
    %1114 = vmatprep.subr.mxu0 0.0
    %1115 = vmatpush1.msra.mxu0 0.0
    %1116 = vmatprep.subr.mxu0 0.0
    %1117 = vmatpush1.msra.mxu0 0.0
    %1118 = vmatprep.subr.mxu0 0.0
    %1119 = vmatpush1.msra.mxu0 0.0
    %1120 = vmatprep.mubr.f32.mxu0 0.0
    %1121 = vmatmul.mubr.f32.gmra.mrb[0].mxu0 %v1038
    %v1122 = vpop.f32.mrb[0].mxu0
    %v1123 = vadd.f32 %v270, %v1122
    %v1124 = vpop.f32.mrb[0].mxu0
    %1125 = vdwg.mxu0
    %s1126 = scalar_lea.vmem [#allocation4], 512
    %v1127 = vld [vmem:[%s1126] sm:$0xff]
    %v1128 = vld [vmem:[%s1126 + $0x8] sm:$0xff]
    %v1129 = vld [vmem:[%s1126 + $0x10] sm:$0xff]
    %v1130 = vld [vmem:[%s1126 + $0x18] sm:$0xff]
    %v1131 = vld [vmem:[%s1126 + $0x20] sm:$0xff]
    %v1132 = vld [vmem:[%s1126 + $0x28] sm:$0xff]
    %v1133 = vld [vmem:[%s1126 + $0x30] sm:$0xff]
    %v1134 = vld [vmem:[%s1126 + $0x38] sm:$0xff]
    %v1135 = vld [vmem:[%s1126 + $0x40] sm:$0xff]
    %v1136 = vld [vmem:[%s1126 + $0x48] sm:$0xff]
    %v1137 = vld [vmem:[%s1126 + $0x50] sm:$0xff]
    %v1138 = vld [vmem:[%s1126 + $0x58] sm:$0xff]
    %v1139 = vld [vmem:[%s1126 + $0x60] sm:$0xff]
    %v1140 = vld [vmem:[%s1126 + $0x68] sm:$0xff]
    %v1141 = vld [vmem:[%s1126 + $0x70] sm:$0xff]
    %v1142 = vld [vmem:[%s1126 + $0x78] sm:$0xff]
    %1143 = vmatprep.subr.mxu0 0.0
    %1144 = vmatpush1.msra.mxu0 %v1127
    %1145 = vmatprep.subr.mxu0 0.0
    %1146 = vmatpush1.msra.mxu0 %v1128
    %1147 = vmatprep.subr.mxu0 0.0
    %1148 = vmatpush1.msra.mxu0 %v1129
    %1149 = vmatprep.subr.mxu0 0.0
    %1150 = vmatpush1.msra.mxu0 %v1130
    %1151 = vmatprep.subr.mxu0 0.0
    %1152 = vmatpush1.msra.mxu0 %v1131
    %1153 = vmatprep.subr.mxu0 0.0
    %1154 = vmatpush1.msra.mxu0 %v1132
    %1155 = vmatprep.subr.mxu0 0.0
    %1156 = vmatpush1.msra.mxu0 %v1133
    %1157 = vmatprep.subr.mxu0 0.0
    %1158 = vmatpush1.msra.mxu0 %v1134
    %1159 = vmatprep.subr.mxu0 0.0
    %1160 = vmatpush1.msra.mxu0 %v1135
    %1161 = vmatprep.subr.mxu0 0.0
    %1162 = vmatpush1.msra.mxu0 %v1136
    %1163 = vmatprep.subr.mxu0 0.0
    %1164 = vmatpush1.msra.mxu0 %v1137
    %1165 = vmatprep.subr.mxu0 0.0
    %1166 = vmatpush1.msra.mxu0 %v1138
    %1167 = vmatprep.subr.mxu0 0.0
    %1168 = vmatpush1.msra.mxu0 %v1139
    %1169 = vmatprep.subr.mxu0 0.0
    %1170 = vmatpush1.msra.mxu0 %v1140
    %1171 = vmatprep.subr.mxu0 0.0
    %1172 = vmatpush1.msra.mxu0 %v1141
    %1173 = vmatprep.subr.mxu0 0.0
    %1174 = vmatpush1.msra.mxu0 %v1142
    %1175 = vmatprep.subr.mxu0 0.0
    %1176 = vmatpush1.msra.mxu0 0.0
    %1177 = vmatprep.subr.mxu0 0.0
    %1178 = vmatpush1.msra.mxu0 0.0
    %1179 = vmatprep.subr.mxu0 0.0
    %1180 = vmatpush1.msra.mxu0 0.0
    %1181 = vmatprep.subr.mxu0 0.0
    %1182 = vmatpush1.msra.mxu0 0.0
    %1183 = vmatprep.subr.mxu0 0.0
    %1184 = vmatpush1.msra.mxu0 0.0
    %1185 = vmatprep.subr.mxu0 0.0
    %1186 = vmatpush1.msra.mxu0 0.0
    %1187 = vmatprep.subr.mxu0 0.0
    %1188 = vmatpush1.msra.mxu0 0.0
    %1189 = vmatprep.subr.mxu0 0.0
    %1190 = vmatpush1.msra.mxu0 0.0
    %1191 = vmatprep.subr.mxu0 0.0
    %1192 = vmatpush1.msra.mxu0 0.0
    %1193 = vmatprep.subr.mxu0 0.0
    %1194 = vmatpush1.msra.mxu0 0.0
    %1195 = vmatprep.subr.mxu0 0.0
    %1196 = vmatpush1.msra.mxu0 0.0
    %1197 = vmatprep.subr.mxu0 0.0
    %1198 = vmatpush1.msra.mxu0 0.0
    %1199 = vmatprep.subr.mxu0 0.0
    %1200 = vmatpush1.msra.mxu0 0.0
    %1201 = vmatprep.subr.mxu0 0.0
    %1202 = vmatpush1.msra.mxu0 0.0
    %1203 = vmatprep.subr.mxu0 0.0
    %1204 = vmatpush1.msra.mxu0 0.0
    %1205 = vmatprep.subr.mxu0 0.0
    %1206 = vmatpush1.msra.mxu0 0.0
    %1207 = vmatprep.mubr.f32.mxu0 0.0
    %1208 = vmatmul.mubr.f32.gmra.mrb[0].mxu0 %v860
    %v1209 = vpop.f32.mrb[0].mxu0
    %v1210 = vadd.f32 0.0, %v1209
    %v1211 = vpop.f32.mrb[0].mxu0
    %1212 = vdwg.mxu0
    %v1213 = vadd.f32 %v1123, %v1210
    %vm1214 = vcmp.gt.f32.partialorder %v1213, 0.0
    %v1215 = vmul.f32 %v1213, 0.01
    %v1216 = vsel %vm1214, %v1213, %v1215
    %s1217 = scalar_lea.vmem [#allocation2], 640
    %v1218 = vld [vmem:[%s1217] sm:$0xff]
    %v1219 = vld [vmem:[%s1217 + $0x8] sm:$0xff]
    %v1220 = vld [vmem:[%s1217 + $0x10] sm:$0xff]
    %v1221 = vld [vmem:[%s1217 + $0x18] sm:$0xff]
    %v1222 = vld [vmem:[%s1217 + $0x20] sm:$0xff]
    %v1223 = vld [vmem:[%s1217 + $0x28] sm:$0xff]
    %v1224 = vld [vmem:[%s1217 + $0x30] sm:$0xff]
    %v1225 = vld [vmem:[%s1217 + $0x38] sm:$0xff]
    %v1226 = vld [vmem:[%s1217 + $0x40] sm:$0xff]
    %v1227 = vld [vmem:[%s1217 + $0x48] sm:$0xff]
    %v1228 = vld [vmem:[%s1217 + $0x50] sm:$0xff]
    %v1229 = vld [vmem:[%s1217 + $0x58] sm:$0xff]
    %v1230 = vld [vmem:[%s1217 + $0x60] sm:$0xff]
    %v1231 = vld [vmem:[%s1217 + $0x68] sm:$0xff]
    %v1232 = vld [vmem:[%s1217 + $0x70] sm:$0xff]
    %v1233 = vld [vmem:[%s1217 + $0x78] sm:$0xff]
    %1234 = vmatprep.subr.mxu0 0.0
    %1235 = vmatpush1.msra.mxu0 %v1218
    %1236 = vmatprep.subr.mxu0 0.0
    %1237 = vmatpush1.msra.mxu0 %v1219
    %1238 = vmatprep.subr.mxu0 0.0
    %1239 = vmatpush1.msra.mxu0 %v1220
    %1240 = vmatprep.subr.mxu0 0.0
    %1241 = vmatpush1.msra.mxu0 %v1221
    %1242 = vmatprep.subr.mxu0 0.0
    %1243 = vmatpush1.msra.mxu0 %v1222
    %1244 = vmatprep.subr.mxu0 0.0
    %1245 = vmatpush1.msra.mxu0 %v1223
    %1246 = vmatprep.subr.mxu0 0.0
    %1247 = vmatpush1.msra.mxu0 %v1224
    %1248 = vmatprep.subr.mxu0 0.0
    %1249 = vmatpush1.msra.mxu0 %v1225
    %1250 = vmatprep.subr.mxu0 0.0
    %1251 = vmatpush1.msra.mxu0 %v1226
    %1252 = vmatprep.subr.mxu0 0.0
    %1253 = vmatpush1.msra.mxu0 %v1227
    %1254 = vmatprep.subr.mxu0 0.0
    %1255 = vmatpush1.msra.mxu0 %v1228
    %1256 = vmatprep.subr.mxu0 0.0
    %1257 = vmatpush1.msra.mxu0 %v1229
    %1258 = vmatprep.subr.mxu0 0.0
    %1259 = vmatpush1.msra.mxu0 %v1230
    %1260 = vmatprep.subr.mxu0 0.0
    %1261 = vmatpush1.msra.mxu0 %v1231
    %1262 = vmatprep.subr.mxu0 0.0
    %1263 = vmatpush1.msra.mxu0 %v1232
    %1264 = vmatprep.subr.mxu0 0.0
    %1265 = vmatpush1.msra.mxu0 %v1233
    %1266 = vmatprep.subr.mxu0 0.0
    %1267 = vmatpush1.msra.mxu0 0.0
    %1268 = vmatprep.subr.mxu0 0.0
    %1269 = vmatpush1.msra.mxu0 0.0
    %1270 = vmatprep.subr.mxu0 0.0
    %1271 = vmatpush1.msra.mxu0 0.0
    %1272 = vmatprep.subr.mxu0 0.0
    %1273 = vmatpush1.msra.mxu0 0.0
    %1274 = vmatprep.subr.mxu0 0.0
    %1275 = vmatpush1.msra.mxu0 0.0
    %1276 = vmatprep.subr.mxu0 0.0
    %1277 = vmatpush1.msra.mxu0 0.0
    %1278 = vmatprep.subr.mxu0 0.0
    %1279 = vmatpush1.msra.mxu0 0.0
    %1280 = vmatprep.subr.mxu0 0.0
    %1281 = vmatpush1.msra.mxu0 0.0
    %1282 = vmatprep.subr.mxu0 0.0
    %1283 = vmatpush1.msra.mxu0 0.0
    %1284 = vmatprep.subr.mxu0 0.0
    %1285 = vmatpush1.msra.mxu0 0.0
    %1286 = vmatprep.subr.mxu0 0.0
    %1287 = vmatpush1.msra.mxu0 0.0
    %1288 = vmatprep.subr.mxu0 0.0
    %1289 = vmatpush1.msra.mxu0 0.0
    %1290 = vmatprep.subr.mxu0 0.0
    %1291 = vmatpush1.msra.mxu0 0.0
    %1292 = vmatprep.subr.mxu0 0.0
    %1293 = vmatpush1.msra.mxu0 0.0
    %1294 = vmatprep.subr.mxu0 0.0
    %1295 = vmatpush1.msra.mxu0 0.0
    %1296 = vmatprep.subr.mxu0 0.0
    %1297 = vmatpush1.msra.mxu0 0.0
    %1298 = vmatprep.mubr.f32.mxu0 0.0
    %1299 = vmatmul.mubr.f32.gmra.mrb[0].mxu0 %v1216
    %v1300 = vpop.f32.mrb[0].mxu0
    %v1301 = vadd.f32 %v339, %v1300
    %v1302 = vpop.f32.mrb[0].mxu0
    %1303 = vdwg.mxu0
    %s1304 = scalar_lea.vmem [#allocation4], 640
    %v1305 = vld [vmem:[%s1304] sm:$0xff]
    %v1306 = vld [vmem:[%s1304 + $0x8] sm:$0xff]
    %v1307 = vld [vmem:[%s1304 + $0x10] sm:$0xff]
    %v1308 = vld [vmem:[%s1304 + $0x18] sm:$0xff]
    %v1309 = vld [vmem:[%s1304 + $0x20] sm:$0xff]
    %v1310 = vld [vmem:[%s1304 + $0x28] sm:$0xff]
    %v1311 = vld [vmem:[%s1304 + $0x30] sm:$0xff]
    %v1312 = vld [vmem:[%s1304 + $0x38] sm:$0xff]
    %v1313 = vld [vmem:[%s1304 + $0x40] sm:$0xff]
    %v1314 = vld [vmem:[%s1304 + $0x48] sm:$0xff]
    %v1315 = vld [vmem:[%s1304 + $0x50] sm:$0xff]
    %v1316 = vld [vmem:[%s1304 + $0x58] sm:$0xff]
    %v1317 = vld [vmem:[%s1304 + $0x60] sm:$0xff]
    %v1318 = vld [vmem:[%s1304 + $0x68] sm:$0xff]
    %v1319 = vld [vmem:[%s1304 + $0x70] sm:$0xff]
    %v1320 = vld [vmem:[%s1304 + $0x78] sm:$0xff]
    %1321 = vmatprep.subr.mxu0 0.0
    %1322 = vmatpush1.msra.mxu0 %v1305
    %1323 = vmatprep.subr.mxu0 0.0
    %1324 = vmatpush1.msra.mxu0 %v1306
    %1325 = vmatprep.subr.mxu0 0.0
    %1326 = vmatpush1.msra.mxu0 %v1307
    %1327 = vmatprep.subr.mxu0 0.0
    %1328 = vmatpush1.msra.mxu0 %v1308
    %1329 = vmatprep.subr.mxu0 0.0
    %1330 = vmatpush1.msra.mxu0 %v1309
    %1331 = vmatprep.subr.mxu0 0.0
    %1332 = vmatpush1.msra.mxu0 %v1310
    %1333 = vmatprep.subr.mxu0 0.0
    %1334 = vmatpush1.msra.mxu0 %v1311
    %1335 = vmatprep.subr.mxu0 0.0
    %1336 = vmatpush1.msra.mxu0 %v1312
    %1337 = vmatprep.subr.mxu0 0.0
    %1338 = vmatpush1.msra.mxu0 %v1313
    %1339 = vmatprep.subr.mxu0 0.0
    %1340 = vmatpush1.msra.mxu0 %v1314
    %1341 = vmatprep.subr.mxu0 0.0
    %1342 = vmatpush1.msra.mxu0 %v1315
    %1343 = vmatprep.subr.mxu0 0.0
    %1344 = vmatpush1.msra.mxu0 %v1316
    %1345 = vmatprep.subr.mxu0 0.0
    %1346 = vmatpush1.msra.mxu0 %v1317
    %1347 = vmatprep.subr.mxu0 0.0
    %1348 = vmatpush1.msra.mxu0 %v1318
    %1349 = vmatprep.subr.mxu0 0.0
    %1350 = vmatpush1.msra.mxu0 %v1319
    %1351 = vmatprep.subr.mxu0 0.0
    %1352 = vmatpush1.msra.mxu0 %v1320
    %1353 = vmatprep.subr.mxu0 0.0
    %1354 = vmatpush1.msra.mxu0 0.0
    %1355 = vmatprep.subr.mxu0 0.0
    %1356 = vmatpush1.msra.mxu0 0.0
    %1357 = vmatprep.subr.mxu0 0.0
    %1358 = vmatpush1.msra.mxu0 0.0
    %1359 = vmatprep.subr.mxu0 0.0
    %1360 = vmatpush1.msra.mxu0 0.0
    %1361 = vmatprep.subr.mxu0 0.0
    %1362 = vmatpush1.msra.mxu0 0.0
    %1363 = vmatprep.subr.mxu0 0.0
    %1364 = vmatpush1.msra.mxu0 0.0
    %1365 = vmatprep.subr.mxu0 0.0
    %1366 = vmatpush1.msra.mxu0 0.0
    %1367 = vmatprep.subr.mxu0 0.0
    %1368 = vmatpush1.msra.mxu0 0.0
    %1369 = vmatprep.subr.mxu0 0.0
    %1370 = vmatpush1.msra.mxu0 0.0
    %1371 = vmatprep.subr.mxu0 0.0
    %1372 = vmatpush1.msra.mxu0 0.0
    %1373 = vmatprep.subr.mxu0 0.0
    %1374 = vmatpush1.msra.mxu0 0.0
    %1375 = vmatprep.subr.mxu0 0.0
    %1376 = vmatpush1.msra.mxu0 0.0
    %1377 = vmatprep.subr.mxu0 0.0
    %1378 = vmatpush1.msra.mxu0 0.0
    %1379 = vmatprep.subr.mxu0 0.0
    %1380 = vmatpush1.msra.mxu0 0.0
    %1381 = vmatprep.subr.mxu0 0.0
    %1382 = vmatpush1.msra.mxu0 0.0
    %1383 = vmatprep.subr.mxu0 0.0
    %1384 = vmatpush1.msra.mxu0 0.0
    %1385 = vmatprep.mubr.f32.mxu0 0.0
    %1386 = vmatmul.mubr.f32.gmra.mrb[0].mxu0 %v1038
    %v1387 = vpop.f32.mrb[0].mxu0
    %v1388 = vadd.f32 0.0, %v1387
    %v1389 = vpop.f32.mrb[0].mxu0
    %1390 = vdwg.mxu0
    %v1391 = vadd.f32 %v1301, %v1388
    %vm1392 = vcmp.gt.f32.partialorder %v1391, 0.0
    %v1393 = vmul.f32 %v1391, 0.01
    %v1394 = vsel %vm1392, %v1391, %v1393
    %s1395 = scalar_lea.vmem [#allocation2], 768
    %v1396 = vld [vmem:[%s1395] sm:$0xff]
    %v1397 = vld [vmem:[%s1395 + $0x8] sm:$0xff]
    %v1398 = vld [vmem:[%s1395 + $0x10] sm:$0xff]
    %v1399 = vld [vmem:[%s1395 + $0x18] sm:$0xff]
    %v1400 = vld [vmem:[%s1395 + $0x20] sm:$0xff]
    %v1401 = vld [vmem:[%s1395 + $0x28] sm:$0xff]
    %v1402 = vld [vmem:[%s1395 + $0x30] sm:$0xff]
    %v1403 = vld [vmem:[%s1395 + $0x38] sm:$0xff]
    %v1404 = vld [vmem:[%s1395 + $0x40] sm:$0xff]
    %v1405 = vld [vmem:[%s1395 + $0x48] sm:$0xff]
    %v1406 = vld [vmem:[%s1395 + $0x50] sm:$0xff]
    %v1407 = vld [vmem:[%s1395 + $0x58] sm:$0xff]
    %v1408 = vld [vmem:[%s1395 + $0x60] sm:$0xff]
    %v1409 = vld [vmem:[%s1395 + $0x68] sm:$0xff]
    %v1410 = vld [vmem:[%s1395 + $0x70] sm:$0xff]
    %v1411 = vld [vmem:[%s1395 + $0x78] sm:$0xff]
    %1412 = vmatprep.subr.mxu0 0.0
    %1413 = vmatpush1.msra.mxu0 %v1396
    %1414 = vmatprep.subr.mxu0 0.0
    %1415 = vmatpush1.msra.mxu0 %v1397
    %1416 = vmatprep.subr.mxu0 0.0
    %1417 = vmatpush1.msra.mxu0 %v1398
    %1418 = vmatprep.subr.mxu0 0.0
    %1419 = vmatpush1.msra.mxu0 %v1399
    %1420 = vmatprep.subr.mxu0 0.0
    %1421 = vmatpush1.msra.mxu0 %v1400
    %1422 = vmatprep.subr.mxu0 0.0
    %1423 = vmatpush1.msra.mxu0 %v1401
    %1424 = vmatprep.subr.mxu0 0.0
    %1425 = vmatpush1.msra.mxu0 %v1402
    %1426 = vmatprep.subr.mxu0 0.0
    %1427 = vmatpush1.msra.mxu0 %v1403
    %1428 = vmatprep.subr.mxu0 0.0
    %1429 = vmatpush1.msra.mxu0 %v1404
    %1430 = vmatprep.subr.mxu0 0.0
    %1431 = vmatpush1.msra.mxu0 %v1405
    %1432 = vmatprep.subr.mxu0 0.0
    %1433 = vmatpush1.msra.mxu0 %v1406
    %1434 = vmatprep.subr.mxu0 0.0
    %1435 = vmatpush1.msra.mxu0 %v1407
    %1436 = vmatprep.subr.mxu0 0.0
    %1437 = vmatpush1.msra.mxu0 %v1408
    %1438 = vmatprep.subr.mxu0 0.0
    %1439 = vmatpush1.msra.mxu0 %v1409
    %1440 = vmatprep.subr.mxu0 0.0
    %1441 = vmatpush1.msra.mxu0 %v1410
    %1442 = vmatprep.subr.mxu0 0.0
    %1443 = vmatpush1.msra.mxu0 %v1411
    %1444 = vmatprep.subr.mxu0 0.0
    %1445 = vmatpush1.msra.mxu0 0.0
    %1446 = vmatprep.subr.mxu0 0.0
    %1447 = vmatpush1.msra.mxu0 0.0
    %1448 = vmatprep.subr.mxu0 0.0
    %1449 = vmatpush1.msra.mxu0 0.0
    %1450 = vmatprep.subr.mxu0 0.0
    %1451 = vmatpush1.msra.mxu0 0.0
    %1452 = vmatprep.subr.mxu0 0.0
    %1453 = vmatpush1.msra.mxu0 0.0
    %1454 = vmatprep.subr.mxu0 0.0
    %1455 = vmatpush1.msra.mxu0 0.0
    %1456 = vmatprep.subr.mxu0 0.0
    %1457 = vmatpush1.msra.mxu0 0.0
    %1458 = vmatprep.subr.mxu0 0.0
    %1459 = vmatpush1.msra.mxu0 0.0
    %1460 = vmatprep.subr.mxu0 0.0
    %1461 = vmatpush1.msra.mxu0 0.0
    %1462 = vmatprep.subr.mxu0 0.0
    %1463 = vmatpush1.msra.mxu0 0.0
    %1464 = vmatprep.subr.mxu0 0.0
    %1465 = vmatpush1.msra.mxu0 0.0
    %1466 = vmatprep.subr.mxu0 0.0
    %1467 = vmatpush1.msra.mxu0 0.0
    %1468 = vmatprep.subr.mxu0 0.0
    %1469 = vmatpush1.msra.mxu0 0.0
    %1470 = vmatprep.subr.mxu0 0.0
    %1471 = vmatpush1.msra.mxu0 0.0
    %1472 = vmatprep.subr.mxu0 0.0
    %1473 = vmatpush1.msra.mxu0 0.0
    %1474 = vmatprep.subr.mxu0 0.0
    %1475 = vmatpush1.msra.mxu0 0.0
    %1476 = vmatprep.mubr.f32.mxu0 0.0
    %1477 = vmatmul.mubr.f32.gmra.mrb[0].mxu0 %v1394
    %v1478 = vpop.f32.mrb[0].mxu0
    %v1479 = vadd.f32 %v341, %v1478
    %v1480 = vpop.f32.mrb[0].mxu0
    %1481 = vdwg.mxu0
    %s1482 = scalar_lea.vmem [#allocation4], 768
    %v1483 = vld [vmem:[%s1482] sm:$0xff]
    %v1484 = vld [vmem:[%s1482 + $0x8] sm:$0xff]
    %v1485 = vld [vmem:[%s1482 + $0x10] sm:$0xff]
    %v1486 = vld [vmem:[%s1482 + $0x18] sm:$0xff]
    %v1487 = vld [vmem:[%s1482 + $0x20] sm:$0xff]
    %v1488 = vld [vmem:[%s1482 + $0x28] sm:$0xff]
    %v1489 = vld [vmem:[%s1482 + $0x30] sm:$0xff]
    %v1490 = vld [vmem:[%s1482 + $0x38] sm:$0xff]
    %v1491 = vld [vmem:[%s1482 + $0x40] sm:$0xff]
    %v1492 = vld [vmem:[%s1482 + $0x48] sm:$0xff]
    %v1493 = vld [vmem:[%s1482 + $0x50] sm:$0xff]
    %v1494 = vld [vmem:[%s1482 + $0x58] sm:$0xff]
    %v1495 = vld [vmem:[%s1482 + $0x60] sm:$0xff]
    %v1496 = vld [vmem:[%s1482 + $0x68] sm:$0xff]
    %v1497 = vld [vmem:[%s1482 + $0x70] sm:$0xff]
    %v1498 = vld [vmem:[%s1482 + $0x78] sm:$0xff]
    %1499 = vmatprep.subr.mxu0 0.0
    %1500 = vmatpush1.msra.mxu0 %v1483
    %1501 = vmatprep.subr.mxu0 0.0
    %1502 = vmatpush1.msra.mxu0 %v1484
    %1503 = vmatprep.subr.mxu0 0.0
    %1504 = vmatpush1.msra.mxu0 %v1485
    %1505 = vmatprep.subr.mxu0 0.0
    %1506 = vmatpush1.msra.mxu0 %v1486
    %1507 = vmatprep.subr.mxu0 0.0
    %1508 = vmatpush1.msra.mxu0 %v1487
    %1509 = vmatprep.subr.mxu0 0.0
    %1510 = vmatpush1.msra.mxu0 %v1488
    %1511 = vmatprep.subr.mxu0 0.0
    %1512 = vmatpush1.msra.mxu0 %v1489
    %1513 = vmatprep.subr.mxu0 0.0
    %1514 = vmatpush1.msra.mxu0 %v1490
    %1515 = vmatprep.subr.mxu0 0.0
    %1516 = vmatpush1.msra.mxu0 %v1491
    %1517 = vmatprep.subr.mxu0 0.0
    %1518 = vmatpush1.msra.mxu0 %v1492
    %1519 = vmatprep.subr.mxu0 0.0
    %1520 = vmatpush1.msra.mxu0 %v1493
    %1521 = vmatprep.subr.mxu0 0.0
    %1522 = vmatpush1.msra.mxu0 %v1494
    %1523 = vmatprep.subr.mxu0 0.0
    %1524 = vmatpush1.msra.mxu0 %v1495
    %1525 = vmatprep.subr.mxu0 0.0
    %1526 = vmatpush1.msra.mxu0 %v1496
    %1527 = vmatprep.subr.mxu0 0.0
    %1528 = vmatpush1.msra.mxu0 %v1497
    %1529 = vmatprep.subr.mxu0 0.0
    %1530 = vmatpush1.msra.mxu0 %v1498
    %1531 = vmatprep.subr.mxu0 0.0
    %1532 = vmatpush1.msra.mxu0 0.0
    %1533 = vmatprep.subr.mxu0 0.0
    %1534 = vmatpush1.msra.mxu0 0.0
    %1535 = vmatprep.subr.mxu0 0.0
    %1536 = vmatpush1.msra.mxu0 0.0
    %1537 = vmatprep.subr.mxu0 0.0
    %1538 = vmatpush1.msra.mxu0 0.0
    %1539 = vmatprep.subr.mxu0 0.0
    %1540 = vmatpush1.msra.mxu0 0.0
    %1541 = vmatprep.subr.mxu0 0.0
    %1542 = vmatpush1.msra.mxu0 0.0
    %1543 = vmatprep.subr.mxu0 0.0
    %1544 = vmatpush1.msra.mxu0 0.0
    %1545 = vmatprep.subr.mxu0 0.0
    %1546 = vmatpush1.msra.mxu0 0.0
    %1547 = vmatprep.subr.mxu0 0.0
    %1548 = vmatpush1.msra.mxu0 0.0
    %1549 = vmatprep.subr.mxu0 0.0
    %1550 = vmatpush1.msra.mxu0 0.0
    %1551 = vmatprep.subr.mxu0 0.0
    %1552 = vmatpush1.msra.mxu0 0.0
    %1553 = vmatprep.subr.mxu0 0.0
    %1554 = vmatpush1.msra.mxu0 0.0
    %1555 = vmatprep.subr.mxu0 0.0
    %1556 = vmatpush1.msra.mxu0 0.0
    %1557 = vmatprep.subr.mxu0 0.0
    %1558 = vmatpush1.msra.mxu0 0.0
    %1559 = vmatprep.subr.mxu0 0.0
    %1560 = vmatpush1.msra.mxu0 0.0
    %1561 = vmatprep.subr.mxu0 0.0
    %1562 = vmatpush1.msra.mxu0 0.0
    %1563 = vmatprep.mubr.f32.mxu0 0.0
    %1564 = vmatmul.mubr.f32.gmra.mrb[0].mxu0 %v1216
    %v1565 = vpop.f32.mrb[0].mxu0
    %v1566 = vadd.f32 0.0, %v1565
    %v1567 = vpop.f32.mrb[0].mxu0
    %1568 = vdwg.mxu0
    %v1569 = vadd.f32 %v1479, %v1566
    %vm1570 = vcmp.gt.f32.partialorder %v1569, 0.0
    %v1571 = vmul.f32 %v1569, 0.01
    %v1572 = vsel %vm1570, %v1569, %v1571
    %s1573 = scalar_lea.vmem [#allocation2], 896
    %v1574 = vld [vmem:[%s1573] sm:$0xff]
    %v1575 = vld [vmem:[%s1573 + $0x8] sm:$0xff]
    %v1576 = vld [vmem:[%s1573 + $0x10] sm:$0xff]
    %v1577 = vld [vmem:[%s1573 + $0x18] sm:$0xff]
    %v1578 = vld [vmem:[%s1573 + $0x20] sm:$0xff]
    %v1579 = vld [vmem:[%s1573 + $0x28] sm:$0xff]
    %v1580 = vld [vmem:[%s1573 + $0x30] sm:$0xff]
    %v1581 = vld [vmem:[%s1573 + $0x38] sm:$0xff]
    %v1582 = vld [vmem:[%s1573 + $0x40] sm:$0xff]
    %v1583 = vld [vmem:[%s1573 + $0x48] sm:$0xff]
    %v1584 = vld [vmem:[%s1573 + $0x50] sm:$0xff]
    %v1585 = vld [vmem:[%s1573 + $0x58] sm:$0xff]
    %v1586 = vld [vmem:[%s1573 + $0x60] sm:$0xff]
    %v1587 = vld [vmem:[%s1573 + $0x68] sm:$0xff]
    %v1588 = vld [vmem:[%s1573 + $0x70] sm:$0xff]
    %v1589 = vld [vmem:[%s1573 + $0x78] sm:$0xff]
    %s1590 = scalar_lea.vmem [#allocation4], 896
    %v1591 = vld [vmem:[%s1590] sm:$0xff]
    %v1592 = vld [vmem:[%s1590 + $0x8] sm:$0xff]
    %v1593 = vld [vmem:[%s1590 + $0x10] sm:$0xff]
    %v1594 = vld [vmem:[%s1590 + $0x18] sm:$0xff]
    %v1595 = vld [vmem:[%s1590 + $0x20] sm:$0xff]
    %v1596 = vld [vmem:[%s1590 + $0x28] sm:$0xff]
    %v1597 = vld [vmem:[%s1590 + $0x30] sm:$0xff]
    %v1598 = vld [vmem:[%s1590 + $0x38] sm:$0xff]
    %v1599 = vld [vmem:[%s1590 + $0x40] sm:$0xff]
    %v1600 = vld [vmem:[%s1590 + $0x48] sm:$0xff]
    %v1601 = vld [vmem:[%s1590 + $0x50] sm:$0xff]
    %v1602 = vld [vmem:[%s1590 + $0x58] sm:$0xff]
    %v1603 = vld [vmem:[%s1590 + $0x60] sm:$0xff]
    %v1604 = vld [vmem:[%s1590 + $0x68] sm:$0xff]
    %v1605 = vld [vmem:[%s1590 + $0x70] sm:$0xff]
    %v1606 = vld [vmem:[%s1590 + $0x78] sm:$0xff]
    %1607 = vmatprep.subr.mxu0 0.0
    %1608 = vmatpush1.msra.mxu0 %v1591
    %1609 = vmatprep.subr.mxu0 0.0
    %1610 = vmatpush1.msra.mxu0 %v1592
    %1611 = vmatprep.subr.mxu0 0.0
    %1612 = vmatpush1.msra.mxu0 %v1593
    %1613 = vmatprep.subr.mxu0 0.0
    %1614 = vmatpush1.msra.mxu0 %v1594
    %1615 = vmatprep.subr.mxu0 0.0
    %1616 = vmatpush1.msra.mxu0 %v1595
    %1617 = vmatprep.subr.mxu0 0.0
    %1618 = vmatpush1.msra.mxu0 %v1596
    %1619 = vmatprep.subr.mxu0 0.0
    %1620 = vmatpush1.msra.mxu0 %v1597
    %1621 = vmatprep.subr.mxu0 0.0
    %1622 = vmatpush1.msra.mxu0 %v1598
    %1623 = vmatprep.subr.mxu0 0.0
    %1624 = vmatpush1.msra.mxu0 %v1599
    %1625 = vmatprep.subr.mxu0 0.0
    %1626 = vmatpush1.msra.mxu0 %v1600
    %1627 = vmatprep.subr.mxu0 0.0
    %1628 = vmatpush1.msra.mxu0 %v1601
    %1629 = vmatprep.subr.mxu0 0.0
    %1630 = vmatpush1.msra.mxu0 %v1602
    %1631 = vmatprep.subr.mxu0 0.0
    %1632 = vmatpush1.msra.mxu0 %v1603
    %1633 = vmatprep.subr.mxu0 0.0
    %1634 = vmatpush1.msra.mxu0 %v1604
    %1635 = vmatprep.subr.mxu0 0.0
    %1636 = vmatpush1.msra.mxu0 %v1605
    %1637 = vmatprep.subr.mxu0 0.0
    %1638 = vmatpush1.msra.mxu0 %v1606
    %1639 = vmatprep.subr.mxu0 0.0
    %1640 = vmatpush1.msra.mxu0 0.0
    %1641 = vmatprep.subr.mxu0 0.0
    %1642 = vmatpush1.msra.mxu0 0.0
    %1643 = vmatprep.subr.mxu0 0.0
    %1644 = vmatpush1.msra.mxu0 0.0
    %1645 = vmatprep.subr.mxu0 0.0
    %1646 = vmatpush1.msra.mxu0 0.0
    %1647 = vmatprep.subr.mxu0 0.0
    %1648 = vmatpush1.msra.mxu0 0.0
    %1649 = vmatprep.subr.mxu0 0.0
    %1650 = vmatpush1.msra.mxu0 0.0
    %1651 = vmatprep.subr.mxu0 0.0
    %1652 = vmatpush1.msra.mxu0 0.0
    %1653 = vmatprep.subr.mxu0 0.0
    %1654 = vmatpush1.msra.mxu0 0.0
    %1655 = vmatprep.subr.mxu0 0.0
    %1656 = vmatpush1.msra.mxu0 0.0
    %1657 = vmatprep.subr.mxu0 0.0
    %1658 = vmatpush1.msra.mxu0 0.0
    %1659 = vmatprep.subr.mxu0 0.0
    %1660 = vmatpush1.msra.mxu0 0.0
    %1661 = vmatprep.subr.mxu0 0.0
    %1662 = vmatpush1.msra.mxu0 0.0
    %1663 = vmatprep.subr.mxu0 0.0
    %1664 = vmatpush1.msra.mxu0 0.0
    %1665 = vmatprep.subr.mxu0 0.0
    %1666 = vmatpush1.msra.mxu0 0.0
    %1667 = vmatprep.subr.mxu0 0.0
    %1668 = vmatpush1.msra.mxu0 0.0
    %1669 = vmatprep.subr.mxu0 0.0
    %1670 = vmatpush1.msra.mxu0 0.0
    %1671 = vmatprep.mubr.f32.mxu0 0.0
    %1672 = vmatmul.mubr.f32.gmra.mrb[0].mxu0 %v1394
    %v1673 = vpop.f32.mrb[0].mxu0
    %v1674 = vadd.f32 0.0, %v1673
    %v1675 = vpop.f32.mrb[0].mxu0
    %1676 = vdwg.mxu0
    %1677 = vmatprep.subr.mxu0 0.0
    %1678 = vmatpush1.msra.mxu0 %v1574
    %1679 = vmatprep.subr.mxu0 0.0
    %1680 = vmatpush1.msra.mxu0 %v1575
    %1681 = vmatprep.subr.mxu0 0.0
    %1682 = vmatpush1.msra.mxu0 %v1576
    %1683 = vmatprep.subr.mxu0 0.0
    %1684 = vmatpush1.msra.mxu0 %v1577
    %1685 = vmatprep.subr.mxu0 0.0
    %1686 = vmatpush1.msra.mxu0 %v1578
    %1687 = vmatprep.subr.mxu0 0.0
    %1688 = vmatpush1.msra.mxu0 %v1579
    %1689 = vmatprep.subr.mxu0 0.0
    %1690 = vmatpush1.msra.mxu0 %v1580
    %1691 = vmatprep.subr.mxu0 0.0
    %1692 = vmatpush1.msra.mxu0 %v1581
    %1693 = vmatprep.subr.mxu0 0.0
    %1694 = vmatpush1.msra.mxu0 %v1582
    %1695 = vmatprep.subr.mxu0 0.0
    %1696 = vmatpush1.msra.mxu0 %v1583
    %1697 = vmatprep.subr.mxu0 0.0
    %1698 = vmatpush1.msra.mxu0 %v1584
    %1699 = vmatprep.subr.mxu0 0.0
    %1700 = vmatpush1.msra.mxu0 %v1585
    %1701 = vmatprep.subr.mxu0 0.0
    %1702 = vmatpush1.msra.mxu0 %v1586
    %1703 = vmatprep.subr.mxu0 0.0
    %1704 = vmatpush1.msra.mxu0 %v1587
    %1705 = vmatprep.subr.mxu0 0.0
    %1706 = vmatpush1.msra.mxu0 %v1588
    %1707 = vmatprep.subr.mxu0 0.0
    %1708 = vmatpush1.msra.mxu0 %v1589
    %1709 = vmatprep.subr.mxu0 0.0
    %1710 = vmatpush1.msra.mxu0 0.0
    %1711 = vmatprep.subr.mxu0 0.0
    %1712 = vmatpush1.msra.mxu0 0.0
    %1713 = vmatprep.subr.mxu0 0.0
    %1714 = vmatpush1.msra.mxu0 0.0
    %1715 = vmatprep.subr.mxu0 0.0
    %1716 = vmatpush1.msra.mxu0 0.0
    %1717 = vmatprep.subr.mxu0 0.0
    %1718 = vmatpush1.msra.mxu0 0.0
    %1719 = vmatprep.subr.mxu0 0.0
    %1720 = vmatpush1.msra.mxu0 0.0
    %1721 = vmatprep.subr.mxu0 0.0
    %1722 = vmatpush1.msra.mxu0 0.0
    %1723 = vmatprep.subr.mxu0 0.0
    %1724 = vmatpush1.msra.mxu0 0.0
    %1725 = vmatprep.subr.mxu0 0.0
    %1726 = vmatpush1.msra.mxu0 0.0
    %1727 = vmatprep.subr.mxu0 0.0
    %1728 = vmatpush1.msra.mxu0 0.0
    %1729 = vmatprep.subr.mxu0 0.0
    %1730 = vmatpush1.msra.mxu0 0.0
    %1731 = vmatprep.subr.mxu0 0.0
    %1732 = vmatpush1.msra.mxu0 0.0
    %1733 = vmatprep.subr.mxu0 0.0
    %1734 = vmatpush1.msra.mxu0 0.0
    %1735 = vmatprep.subr.mxu0 0.0
    %1736 = vmatpush1.msra.mxu0 0.0
    %1737 = vmatprep.subr.mxu0 0.0
    %1738 = vmatpush1.msra.mxu0 0.0
    %1739 = vmatprep.subr.mxu0 0.0
    %1740 = vmatpush1.msra.mxu0 0.0
    %1741 = vmatprep.mubr.f32.mxu0 0.0
    %1742 = vmatmul.mubr.f32.gmra.mrb[0].mxu0 %v1572
    %v1743 = vpop.f32.mrb[0].mxu0
    %v1744 = vadd.f32 %v1674, %v1743
    %v1745 = vpop.f32.mrb[0].mxu0
    %1746 = vdwg.mxu0
    %v1747 = vadd.f32 %v1744, %v410
    %v1748 = vtanh.pop %v1747
    %v1749 = vadd.f32 %v1748, 1.0
    %v1750 = vmul.f32 %v1749, 0.5
    %1751 = vst [vmem:[%s4] sm:$0xff] %v1750
    // Predicated region
    $region26: #{skip_mlp_forward.1} parent=1 // pred_check
      _
    $region27: #{skip_mlp_forward.1} parent=1 // pred_check_branch
      %1753 = sbr.rel (0) target = $region29
    $region28: #{skip_mlp_forward.1} parent=1 // pred_region
      _
    $region29: #{skip_mlp_forward.1} parent=1 // pred_fallthru
      _
    // Predicated region
    $region30: #{skip_mlp_forward.1} parent=1 // pred_check
      _
    $region31: #{skip_mlp_forward.1} parent=1 // pred_check_branch
      %1755 = sbr.rel (0) target = $region33
    $region32: #{skip_mlp_forward.1} parent=1 // pred_region
      _
    $region33: #{skip_mlp_forward.1} parent=1 // pred_fallthru
      _
    %1756 = vsyncpa [#allocation3], 1
    %1757 = vsyncpa [#allocation5], 1

</llo_original>
